<compile_context>
chip_gen: v6e
topology: v6e:2x2x1
jax: 0.10.0
libtpu: 0.0.40
codegen_flags: <defaults>
</compile_context>

<pallas_src>
import jax
import jax.numpy as jnp
from jax import lax
from jax.experimental import pallas as pl
from jax.experimental.pallas import tpu as pltpu


def _self_attn_kernel(x_nc_ref, x_cn_ref, wqk_ref, bqk_ref, wv_ref, bv_ref,
                      gamma_ref, out_ref, attn_ref, qk_sc, v_sc):
    # Block shapes:
    #   x_nc_ref : (1, N, C)   pixels-major view of x (full batch element)
    #   x_cn_ref : (1, C, N)   channels-major view of x (full batch element)
    #   wqk_ref  : (C, 2*C8)   [Wq^T | Wk^T], bf16
    #   bqk_ref  : (1, 2*C8)   [bq | bk], f32
    #   wv_ref   : (C, C)      Wv, bf16
    #   bv_ref   : (C, 1)      bv, f32
    #   gamma_ref: (1, 1)      SMEM scalar
    #   out_ref  : (1, C, TQ)  lane-dense output tile
    #   attn_ref : (1, TQ, N)  attention rows of this query tile
    #   qk_sc    : (N, 2*C8)   bf16 scratch: q/k projections for this batch elem
    #   v_sc     : (C, N)      bf16 scratch: value projection for this batch elem
    tq = attn_ref.shape[1]
    c8 = qk_sc.shape[1] // 2
    qi = pl.program_id(1)
    row0 = pl.multiple_of(qi * tq, tq)

    # Projections are computed once per batch element (first query tile) and
    # stay resident in VMEM scratch for the remaining query tiles.
    @pl.when(qi == 0)
    def _():
        x_nc = x_nc_ref[0].astype(jnp.bfloat16)                        # (N, C)
        qk = jnp.dot(x_nc, wqk_ref[...],
                     preferred_element_type=jnp.float32) + bqk_ref[...]
        qk_sc[...] = qk.astype(jnp.bfloat16)                           # (N, 2*C8)

        x_cn = x_cn_ref[0].astype(jnp.bfloat16)                        # (C, N)
        v = jnp.dot(wv_ref[...], x_cn,
                    preferred_element_type=jnp.float32) + bv_ref[...]
        v_sc[...] = v.astype(jnp.bfloat16)                             # (C, N)

    qk_rows = qk_sc[pl.ds(row0, tq), :]                                # (TQ, 2*C8)
    q = qk_rows[:, :c8]                                                # (TQ, C8) bf16
    k = qk_sc[...][:, c8:]                                             # (N, C8)  bf16

    # energy[i, j] = <q_i, k_j>; contract the shared last dim (no transposes).
    energy = lax.dot_general(q, k, (((1,), (1,)), ((), ())),
                             preferred_element_type=jnp.float32)       # (TQ, N)

    # Numerically-stable softmax in f32; reciprocal goes to the (idle) EUP slot.
    m = jnp.max(energy, axis=-1, keepdims=True)
    p = jnp.exp(energy - m)
    attn = p * pl.reciprocal(jnp.sum(p, axis=-1, keepdims=True), approx=True)
    attn_ref[0] = attn                                                 # f32 (module returns it)

    # out[c, i] = sum_j v[c, j] * attn[i, j]  -> (C, TQ), lane-dense.
    o_cn = lax.dot_general(v_sc[...], attn.astype(jnp.bfloat16),
                           (((1,), (1,)), ((), ())),
                           preferred_element_type=jnp.float32)         # (C, TQ)

    gamma = gamma_ref[0, 0]
    x_res = x_cn_ref[0, :, pl.ds(row0, tq)]                            # (C, TQ) f32
    out_ref[0] = gamma * o_cn + x_res


def _choose_tq(n, max_tq):
    """Largest multiple of 128 that divides n, is <= max_tq, and keeps a few
    (TQ, N) f32 buffers within a conservative VMEM budget.  Falls back to a
    single full query tile (TQ = n) when no such divisor exists."""
    budget_bytes = 24 * 1024 * 1024
    cap = min(max_tq, max(128, budget_bytes // (16 * n)))
    best = None
    d = 128
    while d <= min(cap, n):
        if n % d == 0:
            best = d
        d += 128
    return best if best is not None else n


def self_attn_pallas(x_nchw, params, gamma, *, max_tq=512):
    """x_nchw: (B, C, W, H) float32. Returns (out_nchw, attention (B, N, N))."""
    wq, bq, wk, bk, wv, bv = params
    B, C, W, H = x_nchw.shape
    C8 = wq.shape[0]
    N = W * H
    TQ = _choose_tq(N, max_tq)
    NQ = N // TQ

    # Channels-major view is the native NCHW layout (free reshape); the
    # pixels-major view needs one XLA transpose (tiny vs. the (N, N) attention).
    x_cn = x_nchw.reshape(B, C, N).astype(jnp.float32)                 # (B, C, N)
    x_nc = jnp.transpose(x_cn, (0, 2, 1))                              # (B, N, C)

    # Fused, pre-transposed projection weights (bf16 MXU operands); biases f32.
    wqk = jnp.concatenate([wq.T, wk.T], axis=1).astype(jnp.bfloat16)   # (C, 2*C8)
    bqk = jnp.concatenate([bq, bk]).reshape(1, 2 * C8).astype(jnp.float32)
    wv_b = wv.astype(jnp.bfloat16)                                     # (C, C)
    bv_c = bv.reshape(C, 1).astype(jnp.float32)
    gamma_arr = jnp.asarray(gamma, dtype=jnp.float32).reshape(1, 1)

    out_cn, attn = pl.pallas_call(
        _self_attn_kernel,
        out_shape=(
            jax.ShapeDtypeStruct((B, C, N), jnp.float32),
            # TODO(synk): at large N this (B, N, N) writeback dominates HBM
            # traffic; make it bf16 (or drop it, flash-style) if callers allow.
            jax.ShapeDtypeStruct((B, N, N), jnp.float32),
        ),
        grid_spec=pltpu.PrefetchScalarGridSpec(
            num_scalar_prefetch=0,
            grid=(B, NQ),
            in_specs=[
                pl.BlockSpec((1, N, C), lambda b, q: (b, 0, 0)),    # x pixels-major
                pl.BlockSpec((1, C, N), lambda b, q: (b, 0, 0)),    # x channels-major
                pl.BlockSpec((C, 2 * C8), lambda b, q: (0, 0)),     # [Wq^T | Wk^T]
                pl.BlockSpec((1, 2 * C8), lambda b, q: (0, 0)),     # [bq | bk]
                pl.BlockSpec((C, C), lambda b, q: (0, 0)),          # Wv
                pl.BlockSpec((C, 1), lambda b, q: (0, 0)),          # bv
                pl.BlockSpec(memory_space=pltpu.MemorySpace.SMEM),  # gamma scalar
            ],
            out_specs=[
                pl.BlockSpec((1, C, TQ), lambda b, q: (b, 0, q)),   # lane-dense out
                pl.BlockSpec((1, TQ, N), lambda b, q: (b, q, 0)),   # attention rows
            ],
            scratch_shapes=[
                pltpu.VMEM((N, 2 * C8), jnp.bfloat16),   # per-batch q/k projections
                pltpu.VMEM((C, N), jnp.bfloat16),        # per-batch value projection
            ],
        ),
        compiler_params=pltpu.CompilerParams(
            # Query-tile axis is "arbitrary": tiles of one batch element share
            # the per-batch projection scratch computed at the first tile.
            dimension_semantics=("parallel", "arbitrary"),
            vmem_limit_bytes=48 * 1024 * 1024,
        ),
    )(x_nc, x_cn, wqk, bqk, wv_b, bv_c, gamma_arr)

    # No output transpose needed: the kernel already wrote (B, C, N).
    return out_cn.reshape(B, C, W, H), attn


def _reference(x_nchw, params, gamma):
    """Pure-JAX f32 reference mirroring the PyTorch forward."""
    wq, bq, wk, bk, wv, bv = params
    B, C, W, H = x_nchw.shape
    N = W * H
    x_cn = x_nchw.reshape(B, C, N)
    q = jnp.einsum("dc,bcn->bnd", wq, x_cn) + bq                        # (B, N, C8)
    k = jnp.einsum("dc,bcn->bdn", wk, x_cn) + bk[None, :, None]         # (B, C8, N)
    energy = jnp.einsum("bnd,bdm->bnm", q, k)                           # (B, N, N)
    attn = jax.nn.softmax(energy, axis=-1)
    v = jnp.einsum("dc,bcn->bdn", wv, x_cn) + bv[None, :, None]         # (B, C, N)
    o = jnp.einsum("bcn,bmn->bcm", v, attn)                             # (B, C, N)
    out = gamma * o + x_cn
    return out.reshape(B, C, W, H), attn


if __name__ == "__main__":
    B, C, W, H = 2, 16, 16, 16
    C8 = C // 8
    gamma = 0.5

    key = jax.random.PRNGKey(0)
    kx, kwq, kbq, kwk, kbk, kwv, kbv = jax.random.split(key, 7)
    x = jax.random.normal(kx, (B, C, W, H), dtype=jnp.float32)

    scale = 0.1
    wq = scale * jax.random.normal(kwq, (C8, C), dtype=jnp.float32)
    bq = scale * jax.random.normal(kbq, (C8,), dtype=jnp.float32)
    wk = scale * jax.random.normal(kwk, (C8, C), dtype=jnp.float32)
    bk = scale * jax.random.normal(kbk, (C8,), dtype=jnp.float32)
    wv = scale * jax.random.normal(kwv, (C, C), dtype=jnp.float32)
    bv = scale * jax.random.normal(kbv, (C,), dtype=jnp.float32)
    params = (wq, bq, wk, bk, wv, bv)

    # max_tq=128 so the test exercises the multi-query-tile path (grid=(B, 2)).
    out, attn = self_attn_pallas(x, params, gamma, max_tq=128)
    out = jax.block_until_ready(out)
    attn = jax.block_until_ready(attn)

    ref_out, ref_attn = _reference(x, params, gamma)
    N = W * H
    assert out.shape == (B, C, W, H) and attn.shape == (B, N, N)
    # bf16 MXU operands + approx reciprocal -> slightly looser than pure-f32.
    assert jnp.allclose(out, ref_out, atol=1e-2, rtol=1e-2), \
        float(jnp.max(jnp.abs(out - ref_out)))
    assert jnp.allclose(attn, ref_attn, atol=2e-3, rtol=1e-2), \
        float(jnp.max(jnp.abs(attn - ref_attn)))

    print("KERNEL_OK")
</pallas_src>

<mosaic_0001>
module attributes {stable_mosaic.version = 11 : i64} {
  func.func @_self_attn_kernel(%arg0: i32, %arg1: i32, %arg2: memref<1x256x16xf32, #tpu.memory_space<vmem>>, %arg3: memref<1x16x256xf32, #tpu.memory_space<vmem>>, %arg4: memref<16x4xbf16, #tpu.memory_space<vmem>>, %arg5: memref<1x4xf32, #tpu.memory_space<vmem>>, %arg6: memref<16x16xbf16, #tpu.memory_space<vmem>>, %arg7: memref<16x1xf32, #tpu.memory_space<vmem>>, %arg8: memref<1x1xf32, #tpu.memory_space<smem>>, %arg9: memref<1x16x128xf32, #tpu.memory_space<vmem>>, %arg10: memref<1x128x256xf32, #tpu.memory_space<vmem>>, %arg11: memref<256x4xbf16, #tpu.memory_space<vmem>>, %arg12: memref<16x256xbf16, #tpu.memory_space<vmem>>) attributes {dimension_semantics = [#tpu.dimension_semantics<parallel>, #tpu.dimension_semantics<arbitrary>], iteration_bounds = array<i64: 2, 2>, scalar_prefetch = 0 : i64, scratch_operands = 2 : i64, tpu.core_type = #tpu.core_type<tc>, window_params = [{transform_indices = @transform_0, window_bounds = array<i64: 1, 256, 16>}, {transform_indices = @transform_1, window_bounds = array<i64: 1, 16, 256>}, {pipeline_mode = #tpu.pipeline_mode<synchronous>, transform_indices = @transform_2, window_bounds = array<i64: 16, 4>}, {pipeline_mode = #tpu.pipeline_mode<synchronous>, transform_indices = @transform_3, window_bounds = array<i64: 1, 4>}, {pipeline_mode = #tpu.pipeline_mode<synchronous>, transform_indices = @transform_4, window_bounds = array<i64: 16, 16>}, {pipeline_mode = #tpu.pipeline_mode<synchronous>, transform_indices = @transform_5, window_bounds = array<i64: 16, 1>}, {transform_indices = @transform_6, window_bounds = array<i64: 1, 1>}, {transform_indices = @transform_7, window_bounds = array<i64: 1, 16, 128>}, {transform_indices = @transform_8, window_bounds = array<i64: 1, 128, 256>}]} {
    %c128_i32 = arith.constant 128 : i32
    %0 = arith.muli %arg1, %c128_i32 : i32
    %1 = tpu.assume_multiple %0, 128 : i32
    %c0_i32 = arith.constant 0 : i32
    %2 = arith.cmpi eq, %arg1, %c0_i32 : i32
    %3 = arith.extui %2 : i1 to i32
    %c0_i32_0 = arith.constant 0 : i32
    %4 = arith.cmpi ne, %3, %c0_i32_0 : i32
    scf.if %4 {
      %c0_18 = arith.constant 0 : index
      %c0_19 = arith.constant 0 : index
      %c0_20 = arith.constant 0 : index
      %37 = vector.load %arg2[%c0_18, %c0_19, %c0_20] : memref<1x256x16xf32, #tpu.memory_space<vmem>>, vector<1x256x16xf32>
      %38 = vector.shape_cast %37 : vector<1x256x16xf32> to vector<256x16xf32>
      %39 = arith.truncf %38 : vector<256x16xf32> to vector<256x16xbf16>
      %c0_21 = arith.constant 0 : index
      %c0_22 = arith.constant 0 : index
      %40 = vector.load %arg4[%c0_21, %c0_22] : memref<16x4xbf16, #tpu.memory_space<vmem>>, vector<16x4xbf16>
      %cst_23 = arith.constant dense<0.000000e+00> : vector<256x4xf32>
      %41 = tpu.matmul %39, %40, %cst_23 {dimension_numbers = #tpu.dot_dimension_numbers<[1], [0], [0], [1], [0, 0, 1, 1], [], []>} : vector<256x16xbf16>, vector<16x4xbf16>, vector<256x4xf32> -> vector<256x4xf32>
      %c0_24 = arith.constant 0 : index
      %c0_25 = arith.constant 0 : index
      %42 = vector.load %arg5[%c0_24, %c0_25] : memref<1x4xf32, #tpu.memory_space<vmem>>, vector<1x4xf32>
      %43 = vector.broadcast %42 : vector<1x4xf32> to vector<256x4xf32>
      %44 = arith.addf %41, %43 : vector<256x4xf32>
      %45 = arith.truncf %44 : vector<256x4xf32> to vector<256x4xbf16>
      %c0_26 = arith.constant 0 : index
      %c0_27 = arith.constant 0 : index
      %46 = vector.load %arg11[%c0_26, %c0_27] : memref<256x4xbf16, #tpu.memory_space<vmem>>, vector<256x4xbf16>
      tpu.vector_store %arg11[%c0_26, %c0_27], %45 {strides = array<i32>} : memref<256x4xbf16, #tpu.memory_space<vmem>>, vector<256x4xbf16>,
      %c0_28 = arith.constant 0 : index
      %c0_29 = arith.constant 0 : index
      %c0_30 = arith.constant 0 : index
      %47 = vector.load %arg3[%c0_28, %c0_29, %c0_30] : memref<1x16x256xf32, #tpu.memory_space<vmem>>, vector<1x16x256xf32>
      %48 = vector.shape_cast %47 : vector<1x16x256xf32> to vector<16x256xf32>
      %49 = arith.truncf %48 : vector<16x256xf32> to vector<16x256xbf16>
      %c0_31 = arith.constant 0 : index
      %c0_32 = arith.constant 0 : index
      %50 = vector.load %arg6[%c0_31, %c0_32] : memref<16x16xbf16, #tpu.memory_space<vmem>>, vector<16x16xbf16>
      %cst_33 = arith.constant dense<0.000000e+00> : vector<16x256xf32>
      %51 = tpu.matmul %50, %49, %cst_33 {dimension_numbers = #tpu.dot_dimension_numbers<[1], [0], [0], [1], [0, 0, 1, 1], [], []>} : vector<16x16xbf16>, vector<16x256xbf16>, vector<16x256xf32> -> vector<16x256xf32>
      %c0_34 = arith.constant 0 : index
      %c0_35 = arith.constant 0 : index
      %52 = vector.load %arg7[%c0_34, %c0_35] : memref<16x1xf32, #tpu.memory_space<vmem>>, vector<16x1xf32>
      %53 = vector.broadcast %52 : vector<16x1xf32> to vector<16x256xf32>
      %54 = arith.addf %51, %53 : vector<16x256xf32>
      %55 = arith.truncf %54 : vector<16x256xf32> to vector<16x256xbf16>
      %c0_36 = arith.constant 0 : index
      %c0_37 = arith.constant 0 : index
      %56 = vector.load %arg12[%c0_36, %c0_37] : memref<16x256xbf16, #tpu.memory_space<vmem>>, vector<16x256xbf16>
      tpu.vector_store %arg12[%c0_36, %c0_37], %55 {strides = array<i32>} : memref<16x256xbf16, #tpu.memory_space<vmem>>, vector<16x256xbf16>,
    } else {
    }
    %5 = arith.index_cast %1 : i32 to index
    %c0 = arith.constant 0 : index
    %6 = vector.load %arg11[%5, %c0] : memref<256x4xbf16, #tpu.memory_space<vmem>>, vector<128x4xbf16>
    %7 = vector.extract_strided_slice %6 {offsets = [0, 0], sizes = [128, 2], strides = [1, 1]} : vector<128x4xbf16> to vector<128x2xbf16>
    %c0_1 = arith.constant 0 : index
    %c0_2 = arith.constant 0 : index
    %8 = vector.load %arg11[%c0_1, %c0_2] : memref<256x4xbf16, #tpu.memory_space<vmem>>, vector<256x4xbf16>
    %9 = vector.extract_strided_slice %8 {offsets = [0, 2], sizes = [256, 2], strides = [1, 1]} : vector<256x4xbf16> to vector<256x2xbf16>
    %cst = arith.constant dense<0.000000e+00> : vector<128x256xf32>
    %10 = tpu.matmul %7, %9, %cst {dimension_numbers = #tpu.dot_dimension_numbers<[1], [1], [0], [0], [0, 0, 1, 0], [], []>} : vector<128x2xbf16>, vector<256x2xbf16>, vector<128x256xf32> -> vector<128x256xf32>
    %cst_3 = arith.constant dense<0xFF800000> : vector<128xf32>
    %11 = vector.multi_reduction <maximumf>, %10, %cst_3 [1] : vector<128x256xf32> to vector<128xf32>
    %12 = vector.shape_cast %11 : vector<128xf32> to vector<128x1xf32>
    %13 = vector.broadcast %12 : vector<128x1xf32> to vector<128x256xf32>
    %14 = arith.subf %10, %13 : vector<128x256xf32>
    %15 = math.exp %14 : vector<128x256xf32>
    %cst_4 = arith.constant dense<0.000000e+00> : vector<128xf32>
    %16 = vector.multi_reduction <add>, %15, %cst_4 [1] : vector<128x256xf32> to vector<128xf32>
    %17 = vector.shape_cast %16 : vector<128xf32> to vector<128x1xf32>
    %18 = tpu.reciprocal %17 {approx = true} : vector<128x1xf32> -> vector<128x1xf32>
    %19 = vector.broadcast %18 : vector<128x1xf32> to vector<128x256xf32>
    %20 = arith.mulf %15, %19 : vector<128x256xf32>
    %c0_5 = arith.constant 0 : index
    %c0_6 = arith.constant 0 : index
    %c0_7 = arith.constant 0 : index
    %21 = vector.load %arg10[%c0_5, %c0_6, %c0_7] : memref<1x128x256xf32, #tpu.memory_space<vmem>>, vector<1x128x256xf32>
    %22 = vector.shape_cast %21 : vector<1x128x256xf32> to vector<128x256xf32>
    %23 = vector.shape_cast %20 : vector<128x256xf32> to vector<1x128x256xf32>
    tpu.vector_store %arg10[%c0_5, %c0_6, %c0_7], %23 {strides = array<i32>} : memref<1x128x256xf32, #tpu.memory_space<vmem>>, vector<1x128x256xf32>,
    %c0_8 = arith.constant 0 : index
    %c0_9 = arith.constant 0 : index
    %24 = vector.load %arg12[%c0_8, %c0_9] : memref<16x256xbf16, #tpu.memory_space<vmem>>, vector<16x256xbf16>
    %25 = arith.truncf %20 : vector<128x256xf32> to vector<128x256xbf16>
    %cst_10 = arith.constant dense<0.000000e+00> : vector<16x128xf32>
    %26 = tpu.matmul %24, %25, %cst_10 {dimension_numbers = #tpu.dot_dimension_numbers<[1], [1], [0], [0], [0, 0, 1, 0], [], []>} : vector<16x256xbf16>, vector<128x256xbf16>, vector<16x128xf32> -> vector<16x128xf32>
    %c0_11 = arith.constant 0 : index
    %c0_12 = arith.constant 0 : index
    %27 = memref.load %arg8[%c0_11, %c0_12] : memref<1x1xf32, #tpu.memory_space<smem>>
    %c0_13 = arith.constant 0 : index
    %c0_14 = arith.constant 0 : index
    %28 = arith.index_cast %1 : i32 to index
    %29 = vector.load %arg3[%c0_13, %c0_14, %28] : memref<1x16x256xf32, #tpu.memory_space<vmem>>, vector<1x16x128xf32>
    %30 = vector.shape_cast %29 : vector<1x16x128xf32> to vector<16x128xf32>
    %31 = vector.broadcast %27 : f32 to vector<16x128xf32>
    %32 = arith.mulf %31, %26 : vector<16x128xf32>
    %33 = arith.addf %32, %30 : vector<16x128xf32>
    %c0_15 = arith.constant 0 : index
    %c0_16 = arith.constant 0 : index
    %c0_17 = arith.constant 0 : index
    %34 = vector.load %arg9[%c0_15, %c0_16, %c0_17] : memref<1x16x128xf32, #tpu.memory_space<vmem>>, vector<1x16x128xf32>
    %35 = vector.shape_cast %34 : vector<1x16x128xf32> to vector<16x128xf32>
    %36 = vector.shape_cast %33 : vector<16x128xf32> to vector<1x16x128xf32>
    tpu.vector_store %arg9[%c0_15, %c0_16, %c0_17], %36 {strides = array<i32>} : memref<1x16x128xf32, #tpu.memory_space<vmem>>, vector<1x16x128xf32>,
    return
  }
  func.func @transform_0(%arg0: i32, %arg1: i32) -> (i32, i32, i32) {
    %c0_i32 = arith.constant 0 : i32
    %c0_i32_0 = arith.constant 0 : i32
    %c0_i32_1 = arith.constant 0 : i32
    return %arg0, %c0_i32, %c0_i32_0 : i32, i32, i32
  }
  func.func @transform_1(%arg0: i32, %arg1: i32) -> (i32, i32, i32) {
    %c0_i32 = arith.constant 0 : i32
    %c0_i32_0 = arith.constant 0 : i32
    %c0_i32_1 = arith.constant 0 : i32
    return %arg0, %c0_i32, %c0_i32_0 : i32, i32, i32
  }
  func.func @transform_2(%arg0: i32, %arg1: i32) -> (i32, i32) {
    %c0_i32 = arith.constant 0 : i32
    %c0_i32_0 = arith.constant 0 : i32
    %c0_i32_1 = arith.constant 0 : i32
    return %c0_i32, %c0_i32_0 : i32, i32
  }
  func.func @transform_3(%arg0: i32, %arg1: i32) -> (i32, i32) {
    %c0_i32 = arith.constant 0 : i32
    %c0_i32_0 = arith.constant 0 : i32
    %c0_i32_1 = arith.constant 0 : i32
    return %c0_i32, %c0_i32_0 : i32, i32
  }
  func.func @transform_4(%arg0: i32, %arg1: i32) -> (i32, i32) {
    %c0_i32 = arith.constant 0 : i32
    %c0_i32_0 = arith.constant 0 : i32
    %c0_i32_1 = arith.constant 0 : i32
    return %c0_i32, %c0_i32_0 : i32, i32
  }
  func.func @transform_5(%arg0: i32, %arg1: i32) -> (i32, i32) {
    %c0_i32 = arith.constant 0 : i32
    %c0_i32_0 = arith.constant 0 : i32
    %c0_i32_1 = arith.constant 0 : i32
    return %c0_i32, %c0_i32_0 : i32, i32
  }
  func.func @transform_6(%arg0: i32, %arg1: i32) -> (i32, i32) {
    %c0_i32 = arith.constant 0 : i32
    %c0_i32_0 = arith.constant 0 : i32
    %c0_i32_1 = arith.constant 0 : i32
    return %c0_i32, %c0_i32_0 : i32, i32
  }
  func.func @transform_7(%arg0: i32, %arg1: i32) -> (i32, i32, i32) {
    %c0_i32 = arith.constant 0 : i32
    %c0_i32_0 = arith.constant 0 : i32
    return %arg0, %c0_i32, %arg1 : i32, i32, i32
  }
  func.func @transform_8(%arg0: i32, %arg1: i32) -> (i32, i32, i32) {
    %c0_i32 = arith.constant 0 : i32
    %c0_i32_0 = arith.constant 0 : i32
    return %arg0, %arg1, %c0_i32 : i32, i32, i32
  }
}

</mosaic_0001>

<llo_original>
// kernel: tpu_custom_call.1
$region0: #{tpu_custom_call.1}
  #allocation0 [shape = 'u32[]', space=smem, size = 0x4, offset = 0x4, fixed_abs, tag = 'smem constant byte address 0x4 - core index']
  #allocation1 [shape = 'u32[144,128]{1,0:T(1,128)}', space=vmem, size = 0x12000, scoped, tag = 'internal scratch']
  #allocation2 [shape = 'bf16[256,4]{1,0:T(8,128)(2,1)}', space=vmem, size = 0x10000, scoped, tag = 'scratch operand']
  #allocation3 [shape = 'bf16[16,256]{1,0:T(8,128)(2,1)}', space=vmem, size = 0x2000, scoped, tag = 'scratch operand']
  #allocation4 [shape = 'f32[1,1]{1,0:T(1,128)S(6)}', space=smem, size = 0x200, scoped, tag = 'scoped memory for tpu_custom_call.1']
  %s0 = inlined_call_operand.vmem [shape: f32[2,256,16], index: 0, kind: input, shape index: {}]
  %s1 = inlined_call_operand.vmem [shape: f32[2,16,256], index: 1, kind: input, shape index: {}]
  %s2 = inlined_call_operand.vmem [shape: bf16[16,4], index: 2, kind: input, shape index: {}]
  %s3 = inlined_call_operand.vmem [shape: f32[1,4], index: 3, kind: input, shape index: {}]
  %s4 = inlined_call_operand.vmem [shape: bf16[16,16], index: 4, kind: input, shape index: {}]
  %s5 = inlined_call_operand.vmem [shape: f32[16,1], index: 5, kind: input, shape index: {}]
  %s6 = inlined_call_operand.<no memory space> [shape: f32[1,1], index: 6, kind: input, shape index: {}]
  %s7 = inlined_call_operand.hbm [shape: f32[2,16,256], index: 7, kind: output, shape index: {0}]
  %s8 = inlined_call_operand.hbm [shape: f32[2,256,256], index: 8, kind: output, shape index: {1}]
  %9 = xla_tuple %s7, %s8
  %s10 = sld [smem:[#allocation0]]
  $region73: #{tpu_custom_call.1} parent=0
    _
  %s12 = ssub.s32 1, %s10
  %s13 = scalar_select 0, %s12, %s10
  %14 = sst [smem:[#allocation4]] %s6
  $region1: #{tpu_custom_call.1} parent=0
    #allocation5 [shape = 'u8[16384]{0}', space=vmem, size = 0x4000, scoped, tag = 'output window, operand 0']
    #allocation6 [shape = 's32[2]{0}', space=sflag, size = 0x8, scoped, tag = 'scoped memory for tpu_custom_call.1']
    #allocation7 [shape = 'u8[262144]{0}', space=vmem, size = 0x40000, scoped, tag = 'output window, operand 1']
    #allocation8 [shape = 's32[2]{0}', space=sflag, size = 0x8, scoped, tag = 'scoped memory for tpu_custom_call.1']
    %15 = vsyncpa [#allocation6], 0
    %s16 = scalar_lea.sflag [#allocation6], 1
    %17 = vsyncpa %s16, 0
    %18 = vsyncpa [#allocation8], 0
    %s19 = scalar_lea.sflag [#allocation8], 1
    %20 = vsyncpa %s19, 0
    loop: start=0, step=1, limit=6
    $region2: #{tpu_custom_call.1} parent=1 // loop_pre_header
      _
    $region3: #{tpu_custom_call.1} parent=1 // loop_header
      %s22 = sphi 0, %s26
      %p23 = scmp.ge.s32.totalorder %s22, 6
      %s29 = sphi 0, %s41
      %s30 = sphi 0, %s37
      %s31 = sphi 0, %s29
      %s32 = sphi 0, %s30
      %s33 = sphi 0, %s31
      %s34 = sphi 0, %s32
      %s44 = sphi 0, %s46
      %s47 = sphi 0, %s44
      %s48 = sphi 0, %s47
      %s64 = sphi 0, %s48
      %s70 = sphi 0, %s72
      %s73 = sphi 0, %s70
      %s74 = sphi 0, %s73
      %s90 = sphi 0, %s74
      %s94 = sphi 0, %s94
      %s96 = sphi 0, %s94
      %s97 = sphi 0, %s96
      %s111 = sphi 0, %s97
      %s115 = sphi 0, %s115
      %s117 = sphi 0, %s115
      %s118 = sphi 0, %s117
      %s132 = sphi 0, %s118
      %s136 = sphi 0, %s136
      %s138 = sphi 0, %s136
      %s139 = sphi 0, %s138
      %s153 = sphi 0, %s139
      %s157 = sphi 0, %s157
      %s159 = sphi 0, %s157
      %s160 = sphi 0, %s159
      %s174 = sphi 0, %s160
      %s178 = sphi 0, %s178
      %s180 = sphi 0, %s178
      %s181 = sphi 0, %s180
      %s195 = sphi 0, %s181
      %s203 = sphi 0, %s205
      %s206 = sphi 0, %s203
      %s207 = sphi 0, %s206
      %s223 = sphi 0, %s207
      %s231 = sphi 0, %s233
      %s234 = sphi 0, %s231
      %s235 = sphi 0, %s234
      %s251 = sphi 0, %s235
    $region4: #{tpu_custom_call.1} parent=1 // loop_header_branch
      %25 = sbr.rel (%p23) target = $region8
    $region5: #{tpu_custom_call.1} parent=1 // loop_body
      %s27 = ssub.s32 %s22, 1
      %s28 = ssub.s32 %s22, 2
      %s35 = sadd.s32 1, %s30
      %p36 = scmp.ge.s32.totalorder %s35, 2
      %s37 = scalar_select %p36, 0, %s35
      %s38 = sadd.s32 1, %s29
      %s39 = scalar_select %p36, %s38, %s29
      %p40 = scmp.ge.s32.totalorder %s39, 2
      %s41 = scalar_select %p40, 0, %s39
      %s42 = ssub.s32 %s29, %s41
      %p43 = scmp.eq.s32.totalorder %s42, 0
      %s45 = sadd.s32 %s44, 1
      %s46 = scalar_select %p43, %s44, %s45
      %p49 = pneg %p43
      %p50 = scmp.eq.s32.totalorder %s22, 3
      %p51 = por %p49, %p50
      %p52 = scmp.ne.s32.totalorder %s44, %s47
      %p53 = scmp.eq.s32.totalorder %s22, 0
      %p54 = por %p52, %p53
      %p55 = scmp.ne.s32.totalorder %s44, %s47
      %p56 = scmp.eq.s32.totalorder %s27, 3
      %p57 = por %p55, %p56
      %p58 = scmp.ne.s32.totalorder %s47, %s48
      %p59 = scmp.eq.s32.totalorder %s27, 0
      %p60 = por %p58, %p59
      %p61 = scmp.ne.s32.totalorder %s47, %s48
      %p62 = scmp.eq.s32.totalorder %s28, 3
      %p63 = por %p61, %p62
      %p65 = scmp.ne.s32.totalorder %s48, %s64
      %p66 = scmp.eq.s32.totalorder %s28, 0
      %p67 = por %p65, %p66
      %s68 = ssub.s32 %s29, %s41
      %p69 = scmp.eq.s32.totalorder %s68, 0
      %s71 = sadd.s32 %s70, 1
      %s72 = scalar_select %p69, %s70, %s71
      %p75 = pneg %p69
      %p76 = scmp.eq.s32.totalorder %s22, 3
      %p77 = por %p75, %p76
      %p78 = scmp.ne.s32.totalorder %s70, %s73
      %p79 = scmp.eq.s32.totalorder %s22, 0
      %p80 = por %p78, %p79
      %p81 = scmp.ne.s32.totalorder %s70, %s73
      %p82 = scmp.eq.s32.totalorder %s27, 3
      %p83 = por %p81, %p82
      %p84 = scmp.ne.s32.totalorder %s73, %s74
      %p85 = scmp.eq.s32.totalorder %s27, 0
      %p86 = por %p84, %p85
      %p87 = scmp.ne.s32.totalorder %s73, %s74
      %p88 = scmp.eq.s32.totalorder %s28, 3
      %p89 = por %p87, %p88
      %p91 = scmp.ne.s32.totalorder %s74, %s90
      %p92 = scmp.eq.s32.totalorder %s28, 0
      %p93 = por %p91, %p92
      %s95 = sadd.s32 %s94, 1
      %p98 = scmp.eq.s32.totalorder %s22, 3
      %p99 = scmp.ne.s32.totalorder %s94, %s96
      %p100 = scmp.eq.s32.totalorder %s22, 0
      %p101 = por %p99, %p100
      %p102 = scmp.ne.s32.totalorder %s94, %s96
      %p103 = scmp.eq.s32.totalorder %s27, 3
      %p104 = por %p102, %p103
      %p105 = scmp.ne.s32.totalorder %s96, %s97
      %p106 = scmp.eq.s32.totalorder %s27, 0
      %p107 = por %p105, %p106
      %p108 = scmp.ne.s32.totalorder %s96, %s97
      %p109 = scmp.eq.s32.totalorder %s28, 3
      %p110 = por %p108, %p109
      %p112 = scmp.ne.s32.totalorder %s97, %s111
      %p113 = scmp.eq.s32.totalorder %s28, 0
      %p114 = por %p112, %p113
      %s116 = sadd.s32 %s115, 1
      %p119 = scmp.eq.s32.totalorder %s22, 3
      %p120 = scmp.ne.s32.totalorder %s115, %s117
      %p121 = scmp.eq.s32.totalorder %s22, 0
      %p122 = por %p120, %p121
      %p123 = scmp.ne.s32.totalorder %s115, %s117
      %p124 = scmp.eq.s32.totalorder %s27, 3
      %p125 = por %p123, %p124
      %p126 = scmp.ne.s32.totalorder %s117, %s118
      %p127 = scmp.eq.s32.totalorder %s27, 0
      %p128 = por %p126, %p127
      %p129 = scmp.ne.s32.totalorder %s117, %s118
      %p130 = scmp.eq.s32.totalorder %s28, 3
      %p131 = por %p129, %p130
      %p133 = scmp.ne.s32.totalorder %s118, %s132
      %p134 = scmp.eq.s32.totalorder %s28, 0
      %p135 = por %p133, %p134
      %s137 = sadd.s32 %s136, 1
      %p140 = scmp.eq.s32.totalorder %s22, 3
      %p141 = scmp.ne.s32.totalorder %s136, %s138
      %p142 = scmp.eq.s32.totalorder %s22, 0
      %p143 = por %p141, %p142
      %p144 = scmp.ne.s32.totalorder %s136, %s138
      %p145 = scmp.eq.s32.totalorder %s27, 3
      %p146 = por %p144, %p145
      %p147 = scmp.ne.s32.totalorder %s138, %s139
      %p148 = scmp.eq.s32.totalorder %s27, 0
      %p149 = por %p147, %p148
      %p150 = scmp.ne.s32.totalorder %s138, %s139
      %p151 = scmp.eq.s32.totalorder %s28, 3
      %p152 = por %p150, %p151
      %p154 = scmp.ne.s32.totalorder %s139, %s153
      %p155 = scmp.eq.s32.totalorder %s28, 0
      %p156 = por %p154, %p155
      %s158 = sadd.s32 %s157, 1
      %p161 = scmp.eq.s32.totalorder %s22, 3
      %p162 = scmp.ne.s32.totalorder %s157, %s159
      %p163 = scmp.eq.s32.totalorder %s22, 0
      %p164 = por %p162, %p163
      %p165 = scmp.ne.s32.totalorder %s157, %s159
      %p166 = scmp.eq.s32.totalorder %s27, 3
      %p167 = por %p165, %p166
      %p168 = scmp.ne.s32.totalorder %s159, %s160
      %p169 = scmp.eq.s32.totalorder %s27, 0
      %p170 = por %p168, %p169
      %p171 = scmp.ne.s32.totalorder %s159, %s160
      %p172 = scmp.eq.s32.totalorder %s28, 3
      %p173 = por %p171, %p172
      %p175 = scmp.ne.s32.totalorder %s160, %s174
      %p176 = scmp.eq.s32.totalorder %s28, 0
      %p177 = por %p175, %p176
      %s179 = sadd.s32 %s178, 1
      %p182 = scmp.eq.s32.totalorder %s22, 3
      %p183 = scmp.ne.s32.totalorder %s178, %s180
      %p184 = scmp.eq.s32.totalorder %s22, 0
      %p185 = por %p183, %p184
      %p186 = scmp.ne.s32.totalorder %s178, %s180
      %p187 = scmp.eq.s32.totalorder %s27, 3
      %p188 = por %p186, %p187
      %p189 = scmp.ne.s32.totalorder %s180, %s181
      %p190 = scmp.eq.s32.totalorder %s27, 0
      %p191 = por %p189, %p190
      %p192 = scmp.ne.s32.totalorder %s180, %s181
      %p193 = scmp.eq.s32.totalorder %s28, 3
      %p194 = por %p192, %p193
      %p196 = scmp.ne.s32.totalorder %s181, %s195
      %p197 = scmp.eq.s32.totalorder %s28, 0
      %p198 = por %p196, %p197
      %s199 = ssub.s32 %s29, %s41
      %s200 = ssub.s32 %s30, %s37
      %s201 = sor.u32 %s199, %s200
      %p202 = scmp.eq.s32.totalorder %s201, 0
      %s204 = sadd.s32 %s203, 1
      %s205 = scalar_select %p202, %s203, %s204
      %p208 = pneg %p202
      %p209 = scmp.eq.s32.totalorder %s22, 3
      %p210 = por %p208, %p209
      %p211 = scmp.ne.s32.totalorder %s203, %s206
      %p212 = scmp.eq.s32.totalorder %s22, 0
      %p213 = por %p211, %p212
      %p214 = scmp.ne.s32.totalorder %s203, %s206
      %p215 = scmp.eq.s32.totalorder %s27, 3
      %p216 = por %p214, %p215
      %p217 = scmp.ne.s32.totalorder %s206, %s207
      %p218 = scmp.eq.s32.totalorder %s27, 0
      %p219 = por %p217, %p218
      %p220 = scmp.ne.s32.totalorder %s206, %s207
      %p221 = scmp.eq.s32.totalorder %s28, 3
      %p222 = por %p220, %p221
      %p224 = scmp.ne.s32.totalorder %s207, %s223
      %p225 = scmp.eq.s32.totalorder %s28, 0
      %p226 = por %p224, %p225
      %s227 = ssub.s32 %s29, %s41
      %s228 = ssub.s32 %s30, %s37
      %s229 = sor.u32 %s227, %s228
      %p230 = scmp.eq.s32.totalorder %s229, 0
      %s232 = sadd.s32 %s231, 1
      %s233 = scalar_select %p230, %s231, %s232
      %p236 = pneg %p230
      %p237 = scmp.eq.s32.totalorder %s22, 3
      %p238 = por %p236, %p237
      %p239 = scmp.ne.s32.totalorder %s231, %s234
      %p240 = scmp.eq.s32.totalorder %s22, 0
      %p241 = por %p239, %p240
      %p242 = scmp.ne.s32.totalorder %s231, %s234
      %p243 = scmp.eq.s32.totalorder %s27, 3
      %p244 = por %p242, %p243
      %p245 = scmp.ne.s32.totalorder %s234, %s235
      %p246 = scmp.eq.s32.totalorder %s27, 0
      %p247 = por %p245, %p246
      %p248 = scmp.ne.s32.totalorder %s234, %s235
      %p249 = scmp.eq.s32.totalorder %s28, 3
      %p250 = por %p248, %p249
      %p252 = scmp.ne.s32.totalorder %s235, %s251
      %p253 = scmp.eq.s32.totalorder %s28, 0
      %p254 = por %p252, %p253
      %p255 = scmp.le.s32.totalorder 1, %s22
      %p256 = scmp.lt.s32.totalorder %s22, 5
      %p257 = pnand %p255, %p256
      %p258 = pneg %p257
      // Predicated region
      $region9: #{tpu_custom_call.1} parent=5 // pred_check
        _
      $region10: #{tpu_custom_call.1} parent=5 // pred_check_branch
        %260 = sbr.rel (%p257) target = $region12
      $region11: #{tpu_custom_call.1} parent=5 // pred_region
        %s261 = ssub.s32 %s22, 1
        // Predicated region
        $region13: #{tpu_custom_call.1} parent=11 // pred_check
          %p262 = pneg %p107
        $region14: #{tpu_custom_call.1} parent=11 // pred_check_branch
          %264 = sbr.rel (%p262) target = $region16
        $region15: #{tpu_custom_call.1} parent=11 // pred_region
          _
        $region16: #{tpu_custom_call.1} parent=11 // pred_fallthru
          _
        // Predicated region
        $region17: #{tpu_custom_call.1} parent=11 // pred_check
          %p265 = pneg %p128
        $region18: #{tpu_custom_call.1} parent=11 // pred_check_branch
          %267 = sbr.rel (%p265) target = $region20
        $region19: #{tpu_custom_call.1} parent=11 // pred_region
          _
        $region20: #{tpu_custom_call.1} parent=11 // pred_fallthru
          _
        // Predicated region
        $region21: #{tpu_custom_call.1} parent=11 // pred_check
          %p268 = pneg %p149
        $region22: #{tpu_custom_call.1} parent=11 // pred_check_branch
          %270 = sbr.rel (%p268) target = $region24
        $region23: #{tpu_custom_call.1} parent=11 // pred_region
          _
        $region24: #{tpu_custom_call.1} parent=11 // pred_fallthru
          _
        // Predicated region
        $region25: #{tpu_custom_call.1} parent=11 // pred_check
          %p271 = pneg %p170
        $region26: #{tpu_custom_call.1} parent=11 // pred_check_branch
          %273 = sbr.rel (%p271) target = $region28
        $region27: #{tpu_custom_call.1} parent=11 // pred_region
          _
        $region28: #{tpu_custom_call.1} parent=11 // pred_fallthru
          _
        // Predicated region
        $region29: #{tpu_custom_call.1} parent=11 // pred_check
          %p274 = pneg %p191
        $region30: #{tpu_custom_call.1} parent=11 // pred_check_branch
          %276 = sbr.rel (%p274) target = $region32
        $region31: #{tpu_custom_call.1} parent=11 // pred_region
          _
        $region32: #{tpu_custom_call.1} parent=11 // pred_fallthru
          _
      $region12: #{tpu_custom_call.1} parent=5 // pred_fallthru
        _
      %p277 = scmp.lt.s32.totalorder %s22, 4
      // Predicated region
      $region33: #{tpu_custom_call.1} parent=5 // pred_check
        %p278 = pneg %p277
      $region34: #{tpu_custom_call.1} parent=5 // pred_check_branch
        %280 = sbr.rel (%p278) target = $region36
      $region35: #{tpu_custom_call.1} parent=5 // pred_region
        // Predicated region
        $region37: #{tpu_custom_call.1} parent=35 // pred_check
          %p281 = pneg %p54
        $region38: #{tpu_custom_call.1} parent=35 // pred_check_branch
          %283 = sbr.rel (%p281) target = $region40
        $region39: #{tpu_custom_call.1} parent=35 // pred_region
          %p284 = scmp.lt.s32.totalorder %s29, 1
          %s285 = scalar_select %p284, %s29, 1
          %s286 = smul.addr %s285, 32
          %s287 = smul.addr %s286, 8
          %s288 = scalar_lea.vmem %s0, %s287
        $region40: #{tpu_custom_call.1} parent=35 // pred_fallthru
          _
        // Predicated region
        $region41: #{tpu_custom_call.1} parent=35 // pred_check
          %p289 = pneg %p80
        $region42: #{tpu_custom_call.1} parent=35 // pred_check_branch
          %291 = sbr.rel (%p289) target = $region44
        $region43: #{tpu_custom_call.1} parent=35 // pred_region
          %p292 = scmp.lt.s32.totalorder %s29, 1
          %s293 = scalar_select %p292, %s29, 1
          %s294 = smul.addr %s293, 4
          %s295 = smul.addr %s294, 8
          %s296 = scalar_lea.vmem %s1, %s295
        $region44: #{tpu_custom_call.1} parent=35 // pred_fallthru
          _
      $region36: #{tpu_custom_call.1} parent=5 // pred_fallthru
        _
      %p297 = scmp.le.s32.totalorder 1, %s22
      %p298 = scmp.lt.s32.totalorder %s22, 5
      %p299 = pnand %p297, %p298
      %p300 = pneg %p299
      // Predicated region
      $region45: #{tpu_custom_call.1} parent=5 // pred_check
        _
      $region46: #{tpu_custom_call.1} parent=5 // pred_check_branch
        %302 = sbr.rel (%p299) target = $region48
      $region47: #{tpu_custom_call.1} parent=5 // pred_region
        %s303 = ssub.s32 %s22, 1
        %p304 = scmp.lt.s32.totalorder %s31, 1
        %s305 = scalar_select %p304, %s31, 1
        %s306 = smul.addr %s305, 32
        %s307 = smul.addr %s306, 8
        %s308 = scalar_lea.vmem %s0, %s307
        %p309 = pneg %p60
        %p310 = pneg %p57
        %p311 = scmp.lt.s32.totalorder %s31, 1
        %s312 = scalar_select %p311, %s31, 1
        %s313 = smul.addr %s312, 4
        %s314 = smul.addr %s313, 8
        %s315 = scalar_lea.vmem %s1, %s314
        %p316 = pneg %p86
        %p317 = pneg %p83
        %p318 = pneg %p107
        %p319 = pneg %p104
        %p320 = pneg %p128
        %p321 = pneg %p125
        %p322 = pneg %p149
        %p323 = pneg %p146
        %p324 = pneg %p170
        %p325 = pneg %p167
        %p326 = pneg %p191
        %p327 = pneg %p188
        %p328 = pneg %p219
        %p329 = pneg %p216
        %s330 = sand.u32 %s206, 1
        %s331 = scalar_lea.sflag [#allocation6], %s330
        %s332 = sand.u32 %s206, 1
        %s333 = smul.addr %s332, 16
        %s334 = scalar_lea.vmem [#allocation5], %s333
        %p335 = pneg %p247
        %p336 = pneg %p244
        %s337 = sand.u32 %s234, 1
        %s338 = scalar_lea.sflag [#allocation8], %s337
        %s339 = sand.u32 %s234, 1
        %s340 = smul.addr %s339, 256
        %s341 = scalar_lea.vmem [#allocation7], %s340
        %p342 = scmp.lt.s32.totalorder %s31, 1
        %s343 = scalar_select %p342, %s31, 1
        %s344 = smul.addr %s343, 32
        %s345 = smul.addr %s344, 8
        %s346 = scalar_lea.vmem %s0, %s345
        %p347 = scmp.lt.s32.totalorder %s31, 1
        %s348 = scalar_select %p347, %s31, 1
        %s349 = smul.addr %s348, 4
        %s350 = smul.addr %s349, 8
        %s351 = scalar_lea.vmem %s1, %s350
        %s352 = smul.u32 16, %s32
        %s354 = smul.u32 %s32, 128
        %p355 = scmp.eq.s32.totalorder %s32, 0
        // Predicated region
        $region49: #{tpu_custom_call.1} parent=47 // pred_check
          %p356 = pneg %p355
        $region50: #{tpu_custom_call.1} parent=47 // pred_check_branch
          %358 = sbr.rel (%p356) target = $region52
        $region51: #{tpu_custom_call.1} parent=47 // pred_region
          %v359 = vld [vmem:[%s346] sm:$0xff]
          %v360 = vld [vmem:[%s346 + $0x8] sm:$0xff]
          %v361 = vld [vmem:[%s346 + $0x10] sm:$0xff]
          %v362 = vld [vmem:[%s346 + $0x18] sm:$0xff]
          %v363 = vld [vmem:[%s346 + $0x20] sm:$0xff]
          %v364 = vld [vmem:[%s346 + $0x28] sm:$0xff]
          %v365 = vld [vmem:[%s346 + $0x30] sm:$0xff]
          %v366 = vld [vmem:[%s346 + $0x38] sm:$0xff]
          %v367 = vld [vmem:[%s346 + $0x40] sm:$0xff]
          %v368 = vld [vmem:[%s346 + $0x48] sm:$0xff]
          %v369 = vld [vmem:[%s346 + $0x50] sm:$0xff]
          %v370 = vld [vmem:[%s346 + $0x58] sm:$0xff]
          %v371 = vld [vmem:[%s346 + $0x60] sm:$0xff]
          %v372 = vld [vmem:[%s346 + $0x68] sm:$0xff]
          %v373 = vld [vmem:[%s346 + $0x70] sm:$0xff]
          %v374 = vld [vmem:[%s346 + $0x78] sm:$0xff]
          %v375 = vld [vmem:[%s346 + $0x80] sm:$0xff]
          %v376 = vld [vmem:[%s346 + $0x88] sm:$0xff]
          %v377 = vld [vmem:[%s346 + $0x90] sm:$0xff]
          %v378 = vld [vmem:[%s346 + $0x98] sm:$0xff]
          %v379 = vld [vmem:[%s346 + $0xa0] sm:$0xff]
          %v380 = vld [vmem:[%s346 + $0xa8] sm:$0xff]
          %v381 = vld [vmem:[%s346 + $0xb0] sm:$0xff]
          %v382 = vld [vmem:[%s346 + $0xb8] sm:$0xff]
          %v383 = vld [vmem:[%s346 + $0xc0] sm:$0xff]
          %v384 = vld [vmem:[%s346 + $0xc8] sm:$0xff]
          %v385 = vld [vmem:[%s346 + $0xd0] sm:$0xff]
          %v386 = vld [vmem:[%s346 + $0xd8] sm:$0xff]
          %v387 = vld [vmem:[%s346 + $0xe0] sm:$0xff]
          %v388 = vld [vmem:[%s346 + $0xe8] sm:$0xff]
          %v389 = vld [vmem:[%s346 + $0xf0] sm:$0xff]
          %v390 = vld [vmem:[%s346 + $0xf8] sm:$0xff]
          %v391 = vpack.c.bf16 %v360, %v359
          %v392 = vpack.c.bf16 %v362, %v361
          %v393 = vpack.c.bf16 %v364, %v363
          %v394 = vpack.c.bf16 %v366, %v365
          %v395 = vpack.c.bf16 %v368, %v367
          %v396 = vpack.c.bf16 %v370, %v369
          %v397 = vpack.c.bf16 %v372, %v371
          %v398 = vpack.c.bf16 %v374, %v373
          %v399 = vpack.c.bf16 %v376, %v375
          %v400 = vpack.c.bf16 %v378, %v377
          %v401 = vpack.c.bf16 %v380, %v379
          %v402 = vpack.c.bf16 %v382, %v381
          %v403 = vpack.c.bf16 %v384, %v383
          %v404 = vpack.c.bf16 %v386, %v385
          %v405 = vpack.c.bf16 %v388, %v387
          %v406 = vpack.c.bf16 %v390, %v389
          %v407 = vld [vmem:[%s2] sm:$0xf]
          %v408 = vld [vmem:[%s2 + $0x4] sm:$0xf]
          %v409 = vld [vmem:[%s3] sm:$0x1]
          %v411 = vlaneseq
          %v412 = vshrl.u32 %v411, 7
          %v413 = vsub.s32 0, %v412
          %v414 = vrot.slane %v409, %v413
          %v418 = vunpack.c.l.b16 %v407
          %v419 = vunpack.c.l.b16 %v408
          %v420 = vpack.c.b16 %v419, %v418
          %vm422 = vcmask 130048
          %v424 = vsel %vm422, %v391, 0
          %v427 = vsel %vm422, %v392, 0
          %v430 = vsel %vm422, %v393, 0
          %v433 = vsel %vm422, %v394, 0
          %v436 = vsel %vm422, %v395, 0
          %v439 = vsel %vm422, %v396, 0
          %v442 = vsel %vm422, %v397, 0
          %v445 = vsel %vm422, %v398, 0
          %v448 = vsel %vm422, %v399, 0
          %v451 = vsel %vm422, %v400, 0
          %v454 = vsel %vm422, %v401, 0
          %v457 = vsel %vm422, %v402, 0
          %v460 = vsel %vm422, %v403, 0
          %v463 = vsel %vm422, %v404, 0
          %v466 = vsel %vm422, %v405, 0
          %v469 = vsel %vm422, %v406, 0
          %471 = vmatprep.subr.bf16.mxu0 0
          %472 = vmatpush1.bf16.msra.mxu0 0
          %473 = vmatprep.subr.bf16.mxu0 0
          %474 = vmatpush1.bf16.msra.mxu0 0
          %475 = vmatprep.subr.bf16.mxu0 0
          %476 = vmatpush1.bf16.msra.mxu0 0
          %477 = vmatprep.subr.bf16.mxu0 0
          %478 = vmatpush1.bf16.msra.mxu0 0
          %479 = vmatprep.subr.bf16.mxu0 0
          %480 = vmatpush1.bf16.msra.mxu0 0
          %481 = vmatprep.subr.bf16.mxu0 0
          %482 = vmatpush1.bf16.msra.mxu0 0
          %483 = vmatprep.subr.bf16.mxu0 0
          %484 = vmatpush1.bf16.msra.mxu0 0
          %485 = vmatprep.subr.bf16.mxu0 0
          %486 = vmatpush1.bf16.msra.mxu0 %v420
          %487 = vmatprep.subr.bf16.mxu0 0
          %488 = vmatpush2.bf16.msra.mxu0 0
          %489 = vmatprep.subr.bf16.mxu0 0
          %490 = vmatpush2.bf16.msra.mxu0 0
          %491 = vmatprep.subr.bf16.mxu0 0
          %492 = vmatpush2.bf16.msra.mxu0 0
          %493 = vmatprep.subr.bf16.mxu0 0
          %494 = vmatpush2.bf16.msra.mxu0 0
          %495 = vmatprep.subr.bf16.mxu0 0
          %496 = vmatpush2.bf16.msra.mxu0 0
          %497 = vmatprep.subr.bf16.mxu0 0
          %498 = vmatpush2.bf16.msra.mxu0 0
          %499 = vmatprep.subr.bf16.mxu0 0
          %500 = vmatpush2.bf16.msra.mxu0 0
          %501 = vmatprep.subr.bf16.mxu0 0
          %502 = vmatpush2.bf16.msra.mxu0 0
          %503 = vmatprep.mubr.bf16.mxu0 0
          %504 = vmatmul.mubr.bf16.gmra.mxu0 %v424
          %v505 = vpop.f32.mrf.mxu0
          %v506 = vadd.f32 %v414, %v505
          %v507 = vpop.f32.mrf.mxu0
          %v508 = vpop.f32.mrf.mxu0
          %v509 = vadd.f32 %v414, %v508
          %v510 = vpop.f32.mrf.mxu0
          %511 = vmatprep.mubr.bf16.mxu0 0
          %512 = vmatmul.mubr.bf16.gmra.mxu0 %v427
          %v513 = vpop.f32.mrf.mxu0
          %v514 = vadd.f32 %v414, %v513
          %v515 = vpop.f32.mrf.mxu0
          %v516 = vpop.f32.mrf.mxu0
          %v517 = vadd.f32 %v414, %v516
          %v518 = vpop.f32.mrf.mxu0
          %519 = vmatprep.mubr.bf16.mxu0 0
          %520 = vmatmul.mubr.bf16.gmra.mxu0 %v430
          %v521 = vpop.f32.mrf.mxu0
          %v522 = vadd.f32 %v414, %v521
          %v523 = vpop.f32.mrf.mxu0
          %v524 = vpop.f32.mrf.mxu0
          %v525 = vadd.f32 %v414, %v524
          %v526 = vpop.f32.mrf.mxu0
          %527 = vmatprep.mubr.bf16.mxu0 0
          %528 = vmatmul.mubr.bf16.gmra.mxu0 %v433
          %v529 = vpop.f32.mrf.mxu0
          %v530 = vadd.f32 %v414, %v529
          %v531 = vpop.f32.mrf.mxu0
          %v532 = vpop.f32.mrf.mxu0
          %v533 = vadd.f32 %v414, %v532
          %v534 = vpop.f32.mrf.mxu0
          %535 = vmatprep.mubr.bf16.mxu0 0
          %536 = vmatmul.mubr.bf16.gmra.mxu0 %v436
          %v537 = vpop.f32.mrf.mxu0
          %v538 = vadd.f32 %v414, %v537
          %v539 = vpop.f32.mrf.mxu0
          %v540 = vpop.f32.mrf.mxu0
          %v541 = vadd.f32 %v414, %v540
          %v542 = vpop.f32.mrf.mxu0
          %543 = vmatprep.mubr.bf16.mxu0 0
          %544 = vmatmul.mubr.bf16.gmra.mxu0 %v439
          %v545 = vpop.f32.mrf.mxu0
          %v546 = vadd.f32 %v414, %v545
          %v547 = vpop.f32.mrf.mxu0
          %v548 = vpop.f32.mrf.mxu0
          %v549 = vadd.f32 %v414, %v548
          %v550 = vpop.f32.mrf.mxu0
          %551 = vmatprep.mubr.bf16.mxu0 0
          %552 = vmatmul.mubr.bf16.gmra.mxu0 %v442
          %v553 = vpop.f32.mrf.mxu0
          %v554 = vadd.f32 %v414, %v553
          %v555 = vpop.f32.mrf.mxu0
          %v556 = vpop.f32.mrf.mxu0
          %v557 = vadd.f32 %v414, %v556
          %v558 = vpop.f32.mrf.mxu0
          %559 = vmatprep.mubr.bf16.mxu0 0
          %560 = vmatmul.mubr.bf16.gmra.mxu0 %v445
          %v561 = vpop.f32.mrf.mxu0
          %v562 = vadd.f32 %v414, %v561
          %v563 = vpop.f32.mrf.mxu0
          %v564 = vpop.f32.mrf.mxu0
          %v565 = vadd.f32 %v414, %v564
          %v566 = vpop.f32.mrf.mxu0
          %567 = vmatprep.mubr.bf16.mxu0 0
          %568 = vmatmul.mubr.bf16.gmra.mxu0 %v448
          %v569 = vpop.f32.mrf.mxu0
          %v570 = vadd.f32 %v414, %v569
          %v571 = vpop.f32.mrf.mxu0
          %v572 = vpop.f32.mrf.mxu0
          %v573 = vadd.f32 %v414, %v572
          %v574 = vpop.f32.mrf.mxu0
          %575 = vmatprep.mubr.bf16.mxu0 0
          %576 = vmatmul.mubr.bf16.gmra.mxu0 %v451
          %v577 = vpop.f32.mrf.mxu0
          %v578 = vadd.f32 %v414, %v577
          %v579 = vpop.f32.mrf.mxu0
          %v580 = vpop.f32.mrf.mxu0
          %v581 = vadd.f32 %v414, %v580
          %v582 = vpop.f32.mrf.mxu0
          %583 = vmatprep.mubr.bf16.mxu0 0
          %584 = vmatmul.mubr.bf16.gmra.mxu0 %v454
          %v585 = vpop.f32.mrf.mxu0
          %v586 = vadd.f32 %v414, %v585
          %v587 = vpop.f32.mrf.mxu0
          %v588 = vpop.f32.mrf.mxu0
          %v589 = vadd.f32 %v414, %v588
          %v590 = vpop.f32.mrf.mxu0
          %591 = vmatprep.mubr.bf16.mxu0 0
          %592 = vmatmul.mubr.bf16.gmra.mxu0 %v457
          %v593 = vpop.f32.mrf.mxu0
          %v594 = vadd.f32 %v414, %v593
          %v595 = vpop.f32.mrf.mxu0
          %v596 = vpop.f32.mrf.mxu0
          %v597 = vadd.f32 %v414, %v596
          %v598 = vpop.f32.mrf.mxu0
          %599 = vmatprep.mubr.bf16.mxu0 0
          %600 = vmatmul.mubr.bf16.gmra.mxu0 %v460
          %v601 = vpop.f32.mrf.mxu0
          %v602 = vadd.f32 %v414, %v601
          %v603 = vpop.f32.mrf.mxu0
          %v604 = vpop.f32.mrf.mxu0
          %v605 = vadd.f32 %v414, %v604
          %v606 = vpop.f32.mrf.mxu0
          %607 = vmatprep.mubr.bf16.mxu0 0
          %608 = vmatmul.mubr.bf16.gmra.mxu0 %v463
          %v609 = vpop.f32.mrf.mxu0
          %v610 = vadd.f32 %v414, %v609
          %v611 = vpop.f32.mrf.mxu0
          %v612 = vpop.f32.mrf.mxu0
          %v613 = vadd.f32 %v414, %v612
          %v614 = vpop.f32.mrf.mxu0
          %615 = vmatprep.mubr.bf16.mxu0 0
          %616 = vmatmul.mubr.bf16.gmra.mxu0 %v466
          %v617 = vpop.f32.mrf.mxu0
          %v618 = vadd.f32 %v414, %v617
          %v619 = vpop.f32.mrf.mxu0
          %v620 = vpop.f32.mrf.mxu0
          %v621 = vadd.f32 %v414, %v620
          %v622 = vpop.f32.mrf.mxu0
          %623 = vmatprep.mubr.bf16.mxu0 0
          %624 = vmatmul.mubr.bf16.gmra.mxu0 %v469
          %v625 = vpop.f32.mrf.mxu0
          %v626 = vadd.f32 %v414, %v625
          %v627 = vpop.f32.mrf.mxu0
          %v628 = vpop.f32.mrf.mxu0
          %v629 = vadd.f32 %v414, %v628
          %v630 = vpop.f32.mrf.mxu0
          %631 = vdwg.mxu0
          %v632 = vpack.c.bf16 %v509, %v506
          %v633 = vpack.c.bf16 %v517, %v514
          %v634 = vpack.c.bf16 %v525, %v522
          %v635 = vpack.c.bf16 %v533, %v530
          %v636 = vpack.c.bf16 %v541, %v538
          %v637 = vpack.c.bf16 %v549, %v546
          %v638 = vpack.c.bf16 %v557, %v554
          %v639 = vpack.c.bf16 %v565, %v562
          %v640 = vpack.c.bf16 %v573, %v570
          %v641 = vpack.c.bf16 %v581, %v578
          %v642 = vpack.c.bf16 %v589, %v586
          %v643 = vpack.c.bf16 %v597, %v594
          %v644 = vpack.c.bf16 %v605, %v602
          %v645 = vpack.c.bf16 %v613, %v610
          %v646 = vpack.c.bf16 %v621, %v618
          %v647 = vpack.c.bf16 %v629, %v626
          %v664 = vunpack.c.l.b16 %v632
          %v665 = vunpack.c.h.b16 %v632
          %v666 = vunpack.c.l.b16 %v633
          %v667 = vunpack.c.h.b16 %v633
          %v668 = vunpack.c.l.b16 %v634
          %v669 = vunpack.c.h.b16 %v634
          %v670 = vunpack.c.l.b16 %v635
          %v671 = vunpack.c.h.b16 %v635
          %v672 = vunpack.c.l.b16 %v636
          %v673 = vunpack.c.h.b16 %v636
          %v674 = vunpack.c.l.b16 %v637
          %v675 = vunpack.c.h.b16 %v637
          %v676 = vunpack.c.l.b16 %v638
          %v677 = vunpack.c.h.b16 %v638
          %v678 = vunpack.c.l.b16 %v639
          %v679 = vunpack.c.h.b16 %v639
          %v680 = vunpack.c.l.b16 %v640
          %v681 = vunpack.c.h.b16 %v640
          %v682 = vunpack.c.l.b16 %v641
          %v683 = vunpack.c.h.b16 %v641
          %v684 = vunpack.c.l.b16 %v642
          %v685 = vunpack.c.h.b16 %v642
          %v686 = vunpack.c.l.b16 %v643
          %v687 = vunpack.c.h.b16 %v643
          %v688 = vunpack.c.l.b16 %v644
          %v689 = vunpack.c.h.b16 %v644
          %v690 = vunpack.c.l.b16 %v645
          %v691 = vunpack.c.h.b16 %v645
          %v692 = vunpack.c.l.b16 %v646
          %v693 = vunpack.c.h.b16 %v646
          %v694 = vunpack.c.l.b16 %v647
          %v695 = vunpack.c.h.b16 %v647
          %v696 = vpack.c.b16 %v664, %v664
          %v697 = vpack.c.b16 %v665, %v665
          %v698 = vpack.c.b16 %v666, %v666
          %v699 = vpack.c.b16 %v667, %v667
          %v700 = vpack.c.b16 %v668, %v668
          %v701 = vpack.c.b16 %v669, %v669
          %v702 = vpack.c.b16 %v670, %v670
          %v703 = vpack.c.b16 %v671, %v671
          %v704 = vpack.c.b16 %v672, %v672
          %v705 = vpack.c.b16 %v673, %v673
          %v706 = vpack.c.b16 %v674, %v674
          %v707 = vpack.c.b16 %v675, %v675
          %v708 = vpack.c.b16 %v676, %v676
          %v709 = vpack.c.b16 %v677, %v677
          %v710 = vpack.c.b16 %v678, %v678
          %v711 = vpack.c.b16 %v679, %v679
          %v712 = vpack.c.b16 %v680, %v680
          %v713 = vpack.c.b16 %v681, %v681
          %v714 = vpack.c.b16 %v682, %v682
          %v715 = vpack.c.b16 %v683, %v683
          %v716 = vpack.c.b16 %v684, %v684
          %v717 = vpack.c.b16 %v685, %v685
          %v718 = vpack.c.b16 %v686, %v686
          %v719 = vpack.c.b16 %v687, %v687
          %v720 = vpack.c.b16 %v688, %v688
          %v721 = vpack.c.b16 %v689, %v689
          %v722 = vpack.c.b16 %v690, %v690
          %v723 = vpack.c.b16 %v691, %v691
          %v724 = vpack.c.b16 %v692, %v692
          %v725 = vpack.c.b16 %v693, %v693
          %v726 = vpack.c.b16 %v694, %v694
          %v727 = vpack.c.b16 %v695, %v695
          %vm760 = vcmask 27648
          %761 = vst.msk [vmem:[#allocation2] sm:$0xf] %vm760, %v696
          %762 = vst.msk [vmem:[#allocation2 + $0x4] sm:$0xf] %vm760, %v697
          %763 = vst.msk [vmem:[#allocation2 + $0x8] sm:$0xf] %vm760, %v698
          %764 = vst.msk [vmem:[#allocation2 + $0xc] sm:$0xf] %vm760, %v699
          %765 = vst.msk [vmem:[#allocation2 + $0x10] sm:$0xf] %vm760, %v700
          %766 = vst.msk [vmem:[#allocation2 + $0x14] sm:$0xf] %vm760, %v701
          %767 = vst.msk [vmem:[#allocation2 + $0x18] sm:$0xf] %vm760, %v702
          %768 = vst.msk [vmem:[#allocation2 + $0x1c] sm:$0xf] %vm760, %v703
          %769 = vst.msk [vmem:[#allocation2 + $0x20] sm:$0xf] %vm760, %v704
          %770 = vst.msk [vmem:[#allocation2 + $0x24] sm:$0xf] %vm760, %v705
          %771 = vst.msk [vmem:[#allocation2 + $0x28] sm:$0xf] %vm760, %v706
          %772 = vst.msk [vmem:[#allocation2 + $0x2c] sm:$0xf] %vm760, %v707
          %773 = vst.msk [vmem:[#allocation2 + $0x30] sm:$0xf] %vm760, %v708
          %774 = vst.msk [vmem:[#allocation2 + $0x34] sm:$0xf] %vm760, %v709
          %775 = vst.msk [vmem:[#allocation2 + $0x38] sm:$0xf] %vm760, %v710
          %776 = vst.msk [vmem:[#allocation2 + $0x3c] sm:$0xf] %vm760, %v711
          %777 = vst.msk [vmem:[#allocation2 + $0x40] sm:$0xf] %vm760, %v712
          %778 = vst.msk [vmem:[#allocation2 + $0x44] sm:$0xf] %vm760, %v713
          %779 = vst.msk [vmem:[#allocation2 + $0x48] sm:$0xf] %vm760, %v714
          %780 = vst.msk [vmem:[#allocation2 + $0x4c] sm:$0xf] %vm760, %v715
          %781 = vst.msk [vmem:[#allocation2 + $0x50] sm:$0xf] %vm760, %v716
          %782 = vst.msk [vmem:[#allocation2 + $0x54] sm:$0xf] %vm760, %v717
          %783 = vst.msk [vmem:[#allocation2 + $0x58] sm:$0xf] %vm760, %v718
          %784 = vst.msk [vmem:[#allocation2 + $0x5c] sm:$0xf] %vm760, %v719
          %785 = vst.msk [vmem:[#allocation2 + $0x60] sm:$0xf] %vm760, %v720
          %786 = vst.msk [vmem:[#allocation2 + $0x64] sm:$0xf] %vm760, %v721
          %787 = vst.msk [vmem:[#allocation2 + $0x68] sm:$0xf] %vm760, %v722
          %788 = vst.msk [vmem:[#allocation2 + $0x6c] sm:$0xf] %vm760, %v723
          %789 = vst.msk [vmem:[#allocation2 + $0x70] sm:$0xf] %vm760, %v724
          %790 = vst.msk [vmem:[#allocation2 + $0x74] sm:$0xf] %vm760, %v725
          %791 = vst.msk [vmem:[#allocation2 + $0x78] sm:$0xf] %vm760, %v726
          %792 = vst.msk [vmem:[#allocation2 + $0x7c] sm:$0xf] %vm760, %v727
          %v793 = vld [vmem:[%s351] sm:$0xff]
          %v794 = vld [vmem:[%s351 + $0x8] sm:$0xff]
          %v795 = vld [vmem:[%s351 + $0x10] sm:$0xff]
          %v796 = vld [vmem:[%s351 + $0x18] sm:$0xff]
          %v797 = vpack.c.bf16 %v795, %v793
          %v798 = vpack.c.bf16 %v796, %v794
          %v799 = vld [vmem:[%s4] sm:$0xf]
          %v800 = vld [vmem:[%s4 + $0x4] sm:$0xf]
          %v801 = vld [vmem:[%s5] sm:$0xff]
          %v802 = vld [vmem:[%s5 + $0x8] sm:$0xff]
          %804 = vset.pattern.permute.xlu0 0
          %805 = vperm.xlu0 %804, %v801
          %v806 = vpop.permute.xlu0 %805
          %809 = vset.pattern.permute.xlu0 0
          %810 = vperm.xlu0 %809, %v802
          %v811 = vpop.permute.xlu0 %810
          %v815 = vunpack.c.l.b16 %v799
          %v816 = vunpack.c.l.b16 %v800
          %v817 = vpack.c.b16 %v816, %v815
          %v819 = vsel %vm422, %v817, 0
          %821 = vmatprep.subr.bf16.mxu0 0
          %822 = vmatpush1.bf16.msra.mxu0 0
          %823 = vmatprep.subr.bf16.mxu0 0
          %824 = vmatpush1.bf16.msra.mxu0 0
          %825 = vmatprep.subr.bf16.mxu0 0
          %826 = vmatpush1.bf16.msra.mxu0 0
          %827 = vmatprep.subr.bf16.mxu0 0
          %828 = vmatpush1.bf16.msra.mxu0 0
          %829 = vmatprep.subr.bf16.mxu0 0
          %830 = vmatpush1.bf16.msra.mxu0 0
          %831 = vmatprep.subr.bf16.mxu0 0
          %832 = vmatpush1.bf16.msra.mxu0 0
          %833 = vmatprep.subr.bf16.mxu0 0
          %834 = vmatpush1.bf16.msra.mxu0 0
          %835 = vmatprep.subr.bf16.mxu0 %v798
          %836 = vmatpush1.bf16.msra.mxu0 %v797
          %837 = vmatprep.subr.bf16.mxu0 0
          %838 = vmatpush2.bf16.msra.mxu0 0
          %839 = vmatprep.subr.bf16.mxu0 0
          %840 = vmatpush2.bf16.msra.mxu0 0
          %841 = vmatprep.subr.bf16.mxu0 0
          %842 = vmatpush2.bf16.msra.mxu0 0
          %843 = vmatprep.subr.bf16.mxu0 0
          %844 = vmatpush2.bf16.msra.mxu0 0
          %845 = vmatprep.subr.bf16.mxu0 0
          %846 = vmatpush2.bf16.msra.mxu0 0
          %847 = vmatprep.subr.bf16.mxu0 0
          %848 = vmatpush2.bf16.msra.mxu0 0
          %849 = vmatprep.subr.bf16.mxu0 0
          %850 = vmatpush2.bf16.msra.mxu0 0
          %851 = vmatprep.subr.bf16.mxu0 0
          %852 = vmatpush2.bf16.msra.mxu0 0
          %853 = vmatprep.mubr.bf16.mxu0 0
          %854 = vmatmul.mubr.bf16.gmra.mxu0 %v819
          %v855 = vpop.f32.mrf.mxu0
          %v856 = vadd.f32 %v806, %v855
          %v857 = vpop.f32.mrf.mxu0
          %v858 = vadd.f32 %v806, %v857
          %v859 = vpop.f32.mrf.mxu0
          %v860 = vadd.f32 %v811, %v859
          %v861 = vpop.f32.mrf.mxu0
          %v862 = vadd.f32 %v811, %v861
          %863 = vdwg.mxu0
          %v864 = vpack.c.bf16 %v860, %v856
          %v865 = vpack.c.bf16 %v862, %v858
          %v868 = vunpack.c.l.b16 %v864
          %v869 = vunpack.c.l.b16 %v865
          %v870 = vunpack.c.h.b16 %v864
          %v871 = vunpack.c.h.b16 %v865
          %v872 = vpack.c.b16 %v869, %v868
          %v873 = vpack.c.b16 %v871, %v870
          %876 = vst [vmem:[#allocation3] sm:$0xff] %v872
          %877 = vst [vmem:[#allocation3 + $0x8] sm:$0xff] %v873
        $region52: #{tpu_custom_call.1} parent=47 // pred_fallthru
          _
        %s878 = sshra.s32 %s354, 3
        %s879 = sand.u32 %s354, 7
        %s880 = smul.addr %s878, 4
        %s881 = scalar_lea.vmem [#allocation2], %s880
        %v882 = vld [vmem:[%s881] sm:$0xf]
        %v883 = vld [vmem:[%s881 + $0x4] sm:$0xf]
        %v884 = vld [vmem:[%s881 + $0x8] sm:$0xf]
        %v885 = vld [vmem:[%s881 + $0xc] sm:$0xf]
        %v886 = vld [vmem:[%s881 + $0x10] sm:$0xf]
        %v887 = vld [vmem:[%s881 + $0x14] sm:$0xf]
        %v888 = vld [vmem:[%s881 + $0x18] sm:$0xf]
        %v889 = vld [vmem:[%s881 + $0x1c] sm:$0xf]
        %v890 = vld [vmem:[%s881 + $0x20] sm:$0xf]
        %v891 = vld [vmem:[%s881 + $0x24] sm:$0xf]
        %v892 = vld [vmem:[%s881 + $0x28] sm:$0xf]
        %v893 = vld [vmem:[%s881 + $0x2c] sm:$0xf]
        %v894 = vld [vmem:[%s881 + $0x30] sm:$0xf]
        %v895 = vld [vmem:[%s881 + $0x34] sm:$0xf]
        %v896 = vld [vmem:[%s881 + $0x38] sm:$0xf]
        %v897 = vld [vmem:[%s881 + $0x3c] sm:$0xf]
        %v898 = vld [vmem:[#allocation2] sm:$0xf]
        %v899 = vld [vmem:[#allocation2 + $0x4] sm:$0xf]
        %v900 = vld [vmem:[#allocation2 + $0x8] sm:$0xf]
        %v901 = vld [vmem:[#allocation2 + $0xc] sm:$0xf]
        %v902 = vld [vmem:[#allocation2 + $0x10] sm:$0xf]
        %v903 = vld [vmem:[#allocation2 + $0x14] sm:$0xf]
        %v904 = vld [vmem:[#allocation2 + $0x18] sm:$0xf]
        %v905 = vld [vmem:[#allocation2 + $0x1c] sm:$0xf]
        %v906 = vld [vmem:[#allocation2 + $0x20] sm:$0xf]
        %v907 = vld [vmem:[#allocation2 + $0x24] sm:$0xf]
        %v908 = vld [vmem:[#allocation2 + $0x28] sm:$0xf]
        %v909 = vld [vmem:[#allocation2 + $0x2c] sm:$0xf]
        %v910 = vld [vmem:[#allocation2 + $0x30] sm:$0xf]
        %v911 = vld [vmem:[#allocation2 + $0x34] sm:$0xf]
        %v912 = vld [vmem:[#allocation2 + $0x38] sm:$0xf]
        %v913 = vld [vmem:[#allocation2 + $0x3c] sm:$0xf]
        %v914 = vld [vmem:[#allocation2 + $0x40] sm:$0xf]
        %v915 = vld [vmem:[#allocation2 + $0x44] sm:$0xf]
        %v916 = vld [vmem:[#allocation2 + $0x48] sm:$0xf]
        %v917 = vld [vmem:[#allocation2 + $0x4c] sm:$0xf]
        %v918 = vld [vmem:[#allocation2 + $0x50] sm:$0xf]
        %v919 = vld [vmem:[#allocation2 + $0x54] sm:$0xf]
        %v920 = vld [vmem:[#allocation2 + $0x58] sm:$0xf]
        %v921 = vld [vmem:[#allocation2 + $0x5c] sm:$0xf]
        %v922 = vld [vmem:[#allocation2 + $0x60] sm:$0xf]
        %v923 = vld [vmem:[#allocation2 + $0x64] sm:$0xf]
        %v924 = vld [vmem:[#allocation2 + $0x68] sm:$0xf]
        %v925 = vld [vmem:[#allocation2 + $0x6c] sm:$0xf]
        %v926 = vld [vmem:[#allocation2 + $0x70] sm:$0xf]
        %v927 = vld [vmem:[#allocation2 + $0x74] sm:$0xf]
        %v928 = vld [vmem:[#allocation2 + $0x78] sm:$0xf]
        %v929 = vld [vmem:[#allocation2 + $0x7c] sm:$0xf]
        %v946 = vunpack.c.l.b16 %v882
        %v947 = vunpack.c.l.b16 %v883
        %v948 = vunpack.c.l.b16 %v884
        %v949 = vunpack.c.l.b16 %v885
        %v950 = vunpack.c.l.b16 %v886
        %v951 = vunpack.c.l.b16 %v887
        %v952 = vunpack.c.l.b16 %v888
        %v953 = vunpack.c.l.b16 %v889
        %v954 = vunpack.c.l.b16 %v890
        %v955 = vunpack.c.l.b16 %v891
        %v956 = vunpack.c.l.b16 %v892
        %v957 = vunpack.c.l.b16 %v893
        %v958 = vunpack.c.l.b16 %v894
        %v959 = vunpack.c.l.b16 %v895
        %v960 = vunpack.c.l.b16 %v896
        %v961 = vunpack.c.l.b16 %v897
        %v962 = vpack.c.b16 %v947, %v946
        %v963 = vpack.c.b16 %v949, %v948
        %v964 = vpack.c.b16 %v951, %v950
        %v965 = vpack.c.b16 %v953, %v952
        %v966 = vpack.c.b16 %v955, %v954
        %v967 = vpack.c.b16 %v957, %v956
        %v968 = vpack.c.b16 %v959, %v958
        %v969 = vpack.c.b16 %v961, %v960
        %v1002 = vunpack.c.l.b16 %v898
        %v1003 = vunpack.c.l.b16 %v899
        %v1004 = vunpack.c.l.b16 %v900
        %v1005 = vunpack.c.l.b16 %v901
        %v1006 = vunpack.c.l.b16 %v902
        %v1007 = vunpack.c.l.b16 %v903
        %v1008 = vunpack.c.l.b16 %v904
        %v1009 = vunpack.c.l.b16 %v905
        %v1010 = vunpack.c.l.b16 %v906
        %v1011 = vunpack.c.l.b16 %v907
        %v1012 = vunpack.c.l.b16 %v908
        %v1013 = vunpack.c.l.b16 %v909
        %v1014 = vunpack.c.l.b16 %v910
        %v1015 = vunpack.c.l.b16 %v911
        %v1016 = vunpack.c.l.b16 %v912
        %v1017 = vunpack.c.l.b16 %v913
        %v1018 = vunpack.c.l.b16 %v914
        %v1019 = vunpack.c.l.b16 %v915
        %v1020 = vunpack.c.l.b16 %v916
        %v1021 = vunpack.c.l.b16 %v917
        %v1022 = vunpack.c.l.b16 %v918
        %v1023 = vunpack.c.l.b16 %v919
        %v1024 = vunpack.c.l.b16 %v920
        %v1025 = vunpack.c.l.b16 %v921
        %v1026 = vunpack.c.l.b16 %v922
        %v1027 = vunpack.c.l.b16 %v923
        %v1028 = vunpack.c.l.b16 %v924
        %v1029 = vunpack.c.l.b16 %v925
        %v1030 = vunpack.c.l.b16 %v926
        %v1031 = vunpack.c.l.b16 %v927
        %v1032 = vunpack.c.l.b16 %v928
        %v1033 = vunpack.c.l.b16 %v929
        %v1034 = vpack.c.b16 %v1003, %v1002
        %v1035 = vpack.c.b16 %v1005, %v1004
        %v1036 = vpack.c.b16 %v1007, %v1006
        %v1037 = vpack.c.b16 %v1009, %v1008
        %v1038 = vpack.c.b16 %v1011, %v1010
        %v1039 = vpack.c.b16 %v1013, %v1012
        %v1040 = vpack.c.b16 %v1015, %v1014
        %v1041 = vpack.c.b16 %v1017, %v1016
        %v1042 = vpack.c.b16 %v1019, %v1018
        %v1043 = vpack.c.b16 %v1021, %v1020
        %v1044 = vpack.c.b16 %v1023, %v1022
        %v1045 = vpack.c.b16 %v1025, %v1024
        %v1046 = vpack.c.b16 %v1027, %v1026
        %v1047 = vpack.c.b16 %v1029, %v1028
        %v1048 = vpack.c.b16 %v1031, %v1030
        %v1049 = vpack.c.b16 %v1033, %v1032
        %1050 = vrot.lane.b32.xlu0 %v1034, 126
        %v1051 = vpop.permute.xlu0 %1050
        %1052 = vrot.lane.b32.xlu0 %v1035, 126
        %v1053 = vpop.permute.xlu0 %1052
        %1054 = vrot.lane.b32.xlu0 %v1036, 126
        %v1055 = vpop.permute.xlu0 %1054
        %1056 = vrot.lane.b32.xlu0 %v1037, 126
        %v1057 = vpop.permute.xlu0 %1056
        %1058 = vrot.lane.b32.xlu0 %v1038, 126
        %v1059 = vpop.permute.xlu0 %1058
        %1060 = vrot.lane.b32.xlu0 %v1039, 126
        %v1061 = vpop.permute.xlu0 %1060
        %1062 = vrot.lane.b32.xlu0 %v1040, 126
        %v1063 = vpop.permute.xlu0 %1062
        %1064 = vrot.lane.b32.xlu0 %v1041, 126
        %v1065 = vpop.permute.xlu0 %1064
        %1066 = vrot.lane.b32.xlu0 %v1042, 126
        %v1067 = vpop.permute.xlu0 %1066
        %1068 = vrot.lane.b32.xlu0 %v1043, 126
        %v1069 = vpop.permute.xlu0 %1068
        %1070 = vrot.lane.b32.xlu0 %v1044, 126
        %v1071 = vpop.permute.xlu0 %1070
        %1072 = vrot.lane.b32.xlu0 %v1045, 126
        %v1073 = vpop.permute.xlu0 %1072
        %1074 = vrot.lane.b32.xlu0 %v1046, 126
        %v1075 = vpop.permute.xlu0 %1074
        %1076 = vrot.lane.b32.xlu0 %v1047, 126
        %v1077 = vpop.permute.xlu0 %1076
        %1078 = vrot.lane.b32.xlu0 %v1048, 126
        %v1079 = vpop.permute.xlu0 %1078
        %1080 = vrot.lane.b32.xlu0 %v1049, 126
        %v1081 = vpop.permute.xlu0 %1080
        %vm1082 = vcmask 15360
        %v1084 = vsel %vm1082, %v962, 0
        %v1087 = vsel %vm1082, %v963, 0
        %v1090 = vsel %vm1082, %v964, 0
        %v1093 = vsel %vm1082, %v965, 0
        %v1096 = vsel %vm1082, %v966, 0
        %v1099 = vsel %vm1082, %v967, 0
        %v1102 = vsel %vm1082, %v968, 0
        %v1105 = vsel %vm1082, %v969, 0
        %v1108 = vsel %vm1082, %v1051, 0
        %v1111 = vsel %vm1082, %v1053, 0
        %v1114 = vsel %vm1082, %v1055, 0
        %v1117 = vsel %vm1082, %v1057, 0
        %v1120 = vsel %vm1082, %v1059, 0
        %v1123 = vsel %vm1082, %v1061, 0
        %v1126 = vsel %vm1082, %v1063, 0
        %v1129 = vsel %vm1082, %v1065, 0
        %v1132 = vsel %vm1082, %v1067, 0
        %v1135 = vsel %vm1082, %v1069, 0
        %v1138 = vsel %vm1082, %v1071, 0
        %v1141 = vsel %vm1082, %v1073, 0
        %v1144 = vsel %vm1082, %v1075, 0
        %v1147 = vsel %vm1082, %v1077, 0
        %v1150 = vsel %vm1082, %v1079, 0
        %v1153 = vsel %vm1082, %v1081, 0
        %1155 = vmatprep.subr.bf16.mxu0 0
        %1156 = vmatpush1.bf16.xpose.msra.mxu0 %v1129
        %1157 = vmatprep.subr.bf16.mxu0 0
        %1158 = vmatpush1.bf16.xpose.msra.mxu0 %v1126
        %1159 = vmatprep.subr.bf16.mxu0 0
        %1160 = vmatpush1.bf16.xpose.msra.mxu0 %v1123
        %1161 = vmatprep.subr.bf16.mxu0 0
        %1162 = vmatpush1.bf16.xpose.msra.mxu0 %v1120
        %1163 = vmatprep.subr.bf16.mxu0 0
        %1164 = vmatpush1.bf16.xpose.msra.mxu0 %v1117
        %1165 = vmatprep.subr.bf16.mxu0 0
        %1166 = vmatpush1.bf16.xpose.msra.mxu0 %v1114
        %1167 = vmatprep.subr.bf16.mxu0 0
        %1168 = vmatpush1.bf16.xpose.msra.mxu0 %v1111
        %1169 = vmatprep.subr.bf16.mxu0 0
        %1170 = vmatpush1.bf16.xpose.msra.mxu0 %v1108
        %1171 = vmatprep.subr.bf16.mxu0 0
        %1172 = vmatpush2.bf16.xpose.msra.mxu0 %v1153
        %1173 = vmatprep.subr.bf16.mxu0 0
        %1174 = vmatpush2.bf16.xpose.msra.mxu0 %v1150
        %1175 = vmatprep.subr.bf16.mxu0 0
        %1176 = vmatpush2.bf16.xpose.msra.mxu0 %v1147
        %1177 = vmatprep.subr.bf16.mxu0 0
        %1178 = vmatpush2.bf16.xpose.msra.mxu0 %v1144
        %1179 = vmatprep.subr.bf16.mxu0 0
        %1180 = vmatpush2.bf16.xpose.msra.mxu0 %v1141
        %1181 = vmatprep.subr.bf16.mxu0 0
        %1182 = vmatpush2.bf16.xpose.msra.mxu0 %v1138
        %1183 = vmatprep.subr.bf16.mxu0 0
        %1184 = vmatpush2.bf16.xpose.msra.mxu0 %v1135
        %1185 = vmatprep.subr.bf16.mxu0 0
        %1186 = vmatpush2.bf16.xpose.msra.mxu0 %v1132
        %1187 = vmatprep.mubr.bf16.mxu0 0
        %1188 = vmatmul.mubr.bf16.gmra.mxu0 %v1084
        %v1189 = vpop.f32.mrf.mxu0
        %v1190 = vadd.f32 0.0, %v1189
        %v1191 = vpop.f32.mrf.mxu0
        %v1192 = vadd.f32 0.0, %v1191
        %v1193 = vpop.f32.mrf.mxu0
        %v1194 = vadd.f32 0.0, %v1193
        %v1195 = vpop.f32.mrf.mxu0
        %v1196 = vadd.f32 0.0, %v1195
        %1197 = vmatprep.mubr.bf16.mxu0 0
        %1198 = vmatmul.mubr.bf16.gmra.mxu0 %v1087
        %v1199 = vpop.f32.mrf.mxu0
        %v1200 = vadd.f32 0.0, %v1199
        %v1201 = vpop.f32.mrf.mxu0
        %v1202 = vadd.f32 0.0, %v1201
        %v1203 = vpop.f32.mrf.mxu0
        %v1204 = vadd.f32 0.0, %v1203
        %v1205 = vpop.f32.mrf.mxu0
        %v1206 = vadd.f32 0.0, %v1205
        %1207 = vmatprep.mubr.bf16.mxu0 0
        %1208 = vmatmul.mubr.bf16.gmra.mxu0 %v1090
        %v1209 = vpop.f32.mrf.mxu0
        %v1210 = vadd.f32 0.0, %v1209
        %v1211 = vpop.f32.mrf.mxu0
        %v1212 = vadd.f32 0.0, %v1211
        %v1213 = vpop.f32.mrf.mxu0
        %v1214 = vadd.f32 0.0, %v1213
        %v1215 = vpop.f32.mrf.mxu0
        %v1216 = vadd.f32 0.0, %v1215
        %1217 = vmatprep.mubr.bf16.mxu0 0
        %1218 = vmatmul.mubr.bf16.gmra.mxu0 %v1093
        %v1219 = vpop.f32.mrf.mxu0
        %v1220 = vadd.f32 0.0, %v1219
        %v1221 = vpop.f32.mrf.mxu0
        %v1222 = vadd.f32 0.0, %v1221
        %v1223 = vpop.f32.mrf.mxu0
        %v1224 = vadd.f32 0.0, %v1223
        %v1225 = vpop.f32.mrf.mxu0
        %v1226 = vadd.f32 0.0, %v1225
        %1227 = vmatprep.mubr.bf16.mxu0 0
        %1228 = vmatmul.mubr.bf16.gmra.mxu0 %v1096
        %v1229 = vpop.f32.mrf.mxu0
        %v1230 = vadd.f32 0.0, %v1229
        %v1231 = vpop.f32.mrf.mxu0
        %v1232 = vadd.f32 0.0, %v1231
        %v1233 = vpop.f32.mrf.mxu0
        %v1234 = vadd.f32 0.0, %v1233
        %v1235 = vpop.f32.mrf.mxu0
        %v1236 = vadd.f32 0.0, %v1235
        %1237 = vmatprep.mubr.bf16.mxu0 0
        %1238 = vmatmul.mubr.bf16.gmra.mxu0 %v1099
        %v1239 = vpop.f32.mrf.mxu0
        %v1240 = vadd.f32 0.0, %v1239
        %v1241 = vpop.f32.mrf.mxu0
        %v1242 = vadd.f32 0.0, %v1241
        %v1243 = vpop.f32.mrf.mxu0
        %v1244 = vadd.f32 0.0, %v1243
        %v1245 = vpop.f32.mrf.mxu0
        %v1246 = vadd.f32 0.0, %v1245
        %1247 = vmatprep.mubr.bf16.mxu0 0
        %1248 = vmatmul.mubr.bf16.gmra.mxu0 %v1102
        %v1249 = vpop.f32.mrf.mxu0
        %v1250 = vadd.f32 0.0, %v1249
        %v1251 = vpop.f32.mrf.mxu0
        %v1252 = vadd.f32 0.0, %v1251
        %v1253 = vpop.f32.mrf.mxu0
        %v1254 = vadd.f32 0.0, %v1253
        %v1255 = vpop.f32.mrf.mxu0
        %v1256 = vadd.f32 0.0, %v1255
        %1257 = vmatprep.mubr.bf16.mxu0 0
        %1258 = vmatmul.mubr.bf16.gmra.mxu0 %v1105
        %v1259 = vpop.f32.mrf.mxu0
        %v1260 = vadd.f32 0.0, %v1259
        %v1261 = vpop.f32.mrf.mxu0
        %v1262 = vadd.f32 0.0, %v1261
        %v1263 = vpop.f32.mrf.mxu0
        %v1264 = vadd.f32 0.0, %v1263
        %v1265 = vpop.f32.mrf.mxu0
        %v1266 = vadd.f32 0.0, %v1265
        %1267 = vdwg.mxu0
        %v1268 = vmax.f32 %v1190, %v1192
        %1269 = vmax.xlane.f32.xlu0 %v1268
        %v1270 = vpop.xlane.xlu0 %1269
        %v1271 = vmax.f32 %v1194, %v1196
        %1272 = vmax.xlane.f32.xlu0 %v1271
        %v1273 = vpop.xlane.xlu0 %1272
        %v1274 = vmax.f32 %v1200, %v1202
        %1275 = vmax.xlane.f32.xlu0 %v1274
        %v1276 = vpop.xlane.xlu0 %1275
        %v1277 = vmax.f32 %v1204, %v1206
        %1278 = vmax.xlane.f32.xlu0 %v1277
        %v1279 = vpop.xlane.xlu0 %1278
        %v1280 = vmax.f32 %v1210, %v1212
        %1281 = vmax.xlane.f32.xlu0 %v1280
        %v1282 = vpop.xlane.xlu0 %1281
        %v1283 = vmax.f32 %v1214, %v1216
        %1284 = vmax.xlane.f32.xlu0 %v1283
        %v1285 = vpop.xlane.xlu0 %1284
        %v1286 = vmax.f32 %v1220, %v1222
        %1287 = vmax.xlane.f32.xlu0 %v1286
        %v1288 = vpop.xlane.xlu0 %1287
        %v1289 = vmax.f32 %v1224, %v1226
        %1290 = vmax.xlane.f32.xlu0 %v1289
        %v1291 = vpop.xlane.xlu0 %1290
        %v1292 = vmax.f32 %v1230, %v1232
        %1293 = vmax.xlane.f32.xlu0 %v1292
        %v1294 = vpop.xlane.xlu0 %1293
        %v1295 = vmax.f32 %v1234, %v1236
        %1296 = vmax.xlane.f32.xlu0 %v1295
        %v1297 = vpop.xlane.xlu0 %1296
        %v1298 = vmax.f32 %v1240, %v1242
        %1299 = vmax.xlane.f32.xlu0 %v1298
        %v1300 = vpop.xlane.xlu0 %1299
        %v1301 = vmax.f32 %v1244, %v1246
        %1302 = vmax.xlane.f32.xlu0 %v1301
        %v1303 = vpop.xlane.xlu0 %1302
        %v1304 = vmax.f32 %v1250, %v1252
        %1305 = vmax.xlane.f32.xlu0 %v1304
        %v1306 = vpop.xlane.xlu0 %1305
        %v1307 = vmax.f32 %v1254, %v1256
        %1308 = vmax.xlane.f32.xlu0 %v1307
        %v1309 = vpop.xlane.xlu0 %1308
        %v1310 = vmax.f32 %v1260, %v1262
        %1311 = vmax.xlane.f32.xlu0 %v1310
        %v1312 = vpop.xlane.xlu0 %1311
        %v1313 = vmax.f32 %v1264, %v1266
        %1314 = vmax.xlane.f32.xlu0 %v1313
        %v1315 = vpop.xlane.xlu0 %1314
        %v1316 = vsub.f32 %v1190, %v1270
        %v1317 = vsub.f32 %v1192, %v1270
        %v1318 = vsub.f32 %v1194, %v1273
        %v1319 = vsub.f32 %v1196, %v1273
        %v1320 = vsub.f32 %v1200, %v1276
        %v1321 = vsub.f32 %v1202, %v1276
        %v1322 = vsub.f32 %v1204, %v1279
        %v1323 = vsub.f32 %v1206, %v1279
        %v1324 = vsub.f32 %v1210, %v1282
        %v1325 = vsub.f32 %v1212, %v1282
        %v1326 = vsub.f32 %v1214, %v1285
        %v1327 = vsub.f32 %v1216, %v1285
        %v1328 = vsub.f32 %v1220, %v1288
        %v1329 = vsub.f32 %v1222, %v1288
        %v1330 = vsub.f32 %v1224, %v1291
        %v1331 = vsub.f32 %v1226, %v1291
        %v1332 = vsub.f32 %v1230, %v1294
        %v1333 = vsub.f32 %v1232, %v1294
        %v1334 = vsub.f32 %v1234, %v1297
        %v1335 = vsub.f32 %v1236, %v1297
        %v1336 = vsub.f32 %v1240, %v1300
        %v1337 = vsub.f32 %v1242, %v1300
        %v1338 = vsub.f32 %v1244, %v1303
        %v1339 = vsub.f32 %v1246, %v1303
        %v1340 = vsub.f32 %v1250, %v1306
        %v1341 = vsub.f32 %v1252, %v1306
        %v1342 = vsub.f32 %v1254, %v1309
        %v1343 = vsub.f32 %v1256, %v1309
        %v1344 = vsub.f32 %v1260, %v1312
        %v1345 = vsub.f32 %v1262, %v1312
        %v1346 = vsub.f32 %v1264, %v1315
        %v1347 = vsub.f32 %v1266, %v1315
        %v1348 = vmul.f32 %v1316, 1.442695
        %v1349 = vpow.pop %v1348
        %v1350 = vmul.f32 %v1317, 1.442695
        %v1351 = vpow.pop %v1350
        %v1352 = vmul.f32 %v1318, 1.442695
        %v1353 = vpow.pop %v1352
        %v1354 = vmul.f32 %v1319, 1.442695
        %v1355 = vpow.pop %v1354
        %v1356 = vmul.f32 %v1320, 1.442695
        %v1357 = vpow.pop %v1356
        %v1358 = vmul.f32 %v1321, 1.442695
        %v1359 = vpow.pop %v1358
        %v1360 = vmul.f32 %v1322, 1.442695
        %v1361 = vpow.pop %v1360
        %v1362 = vmul.f32 %v1323, 1.442695
        %v1363 = vpow.pop %v1362
        %v1364 = vmul.f32 %v1324, 1.442695
        %v1365 = vpow.pop %v1364
        %v1366 = vmul.f32 %v1325, 1.442695
        %v1367 = vpow.pop %v1366
        %v1368 = vmul.f32 %v1326, 1.442695
        %v1369 = vpow.pop %v1368
        %v1370 = vmul.f32 %v1327, 1.442695
        %v1371 = vpow.pop %v1370
        %v1372 = vmul.f32 %v1328, 1.442695
        %v1373 = vpow.pop %v1372
        %v1374 = vmul.f32 %v1329, 1.442695
        %v1375 = vpow.pop %v1374
        %v1376 = vmul.f32 %v1330, 1.442695
        %v1377 = vpow.pop %v1376
        %v1378 = vmul.f32 %v1331, 1.442695
        %v1379 = vpow.pop %v1378
        %v1380 = vmul.f32 %v1332, 1.442695
        %v1381 = vpow.pop %v1380
        %v1382 = vmul.f32 %v1333, 1.442695
        %v1383 = vpow.pop %v1382
        %v1384 = vmul.f32 %v1334, 1.442695
        %v1385 = vpow.pop %v1384
        %v1386 = vmul.f32 %v1335, 1.442695
        %v1387 = vpow.pop %v1386
        %v1388 = vmul.f32 %v1336, 1.442695
        %v1389 = vpow.pop %v1388
        %v1390 = vmul.f32 %v1337, 1.442695
        %v1391 = vpow.pop %v1390
        %v1392 = vmul.f32 %v1338, 1.442695
        %v1393 = vpow.pop %v1392
        %v1394 = vmul.f32 %v1339, 1.442695
        %v1395 = vpow.pop %v1394
        %v1396 = vmul.f32 %v1340, 1.442695
        %v1397 = vpow.pop %v1396
        %v1398 = vmul.f32 %v1341, 1.442695
        %v1399 = vpow.pop %v1398
        %v1400 = vmul.f32 %v1342, 1.442695
        %v1401 = vpow.pop %v1400
        %v1402 = vmul.f32 %v1343, 1.442695
        %v1403 = vpow.pop %v1402
        %v1404 = vmul.f32 %v1344, 1.442695
        %v1405 = vpow.pop %v1404
        %v1406 = vmul.f32 %v1345, 1.442695
        %v1407 = vpow.pop %v1406
        %v1408 = vmul.f32 %v1346, 1.442695
        %v1409 = vpow.pop %v1408
        %v1410 = vmul.f32 %v1347, 1.442695
        %v1411 = vpow.pop %v1410
        %v1412 = vadd.f32 %v1349, %v1351
        %1413 = vadd.xlane.f32.xlu0 %v1412
        %v1414 = vpop.xlane.xlu0 %1413
        %v1415 = vadd.f32 %v1353, %v1355
        %1416 = vadd.xlane.f32.xlu0 %v1415
        %v1417 = vpop.xlane.xlu0 %1416
        %v1418 = vadd.f32 %v1357, %v1359
        %1419 = vadd.xlane.f32.xlu0 %v1418
        %v1420 = vpop.xlane.xlu0 %1419
        %v1421 = vadd.f32 %v1361, %v1363
        %1422 = vadd.xlane.f32.xlu0 %v1421
        %v1423 = vpop.xlane.xlu0 %1422
        %v1424 = vadd.f32 %v1365, %v1367
        %1425 = vadd.xlane.f32.xlu0 %v1424
        %v1426 = vpop.xlane.xlu0 %1425
        %v1427 = vadd.f32 %v1369, %v1371
        %1428 = vadd.xlane.f32.xlu0 %v1427
        %v1429 = vpop.xlane.xlu0 %1428
        %v1430 = vadd.f32 %v1373, %v1375
        %1431 = vadd.xlane.f32.xlu0 %v1430
        %v1432 = vpop.xlane.xlu0 %1431
        %v1433 = vadd.f32 %v1377, %v1379
        %1434 = vadd.xlane.f32.xlu0 %v1433
        %v1435 = vpop.xlane.xlu0 %1434
        %v1436 = vadd.f32 %v1381, %v1383
        %1437 = vadd.xlane.f32.xlu0 %v1436
        %v1438 = vpop.xlane.xlu0 %1437
        %v1439 = vadd.f32 %v1385, %v1387
        %1440 = vadd.xlane.f32.xlu0 %v1439
        %v1441 = vpop.xlane.xlu0 %1440
        %v1442 = vadd.f32 %v1389, %v1391
        %1443 = vadd.xlane.f32.xlu0 %v1442
        %v1444 = vpop.xlane.xlu0 %1443
        %v1445 = vadd.f32 %v1393, %v1395
        %1446 = vadd.xlane.f32.xlu0 %v1445
        %v1447 = vpop.xlane.xlu0 %1446
        %v1448 = vadd.f32 %v1397, %v1399
        %1449 = vadd.xlane.f32.xlu0 %v1448
        %v1450 = vpop.xlane.xlu0 %1449
        %v1451 = vadd.f32 %v1401, %v1403
        %1452 = vadd.xlane.f32.xlu0 %v1451
        %v1453 = vpop.xlane.xlu0 %1452
        %v1454 = vadd.f32 %v1405, %v1407
        %1455 = vadd.xlane.f32.xlu0 %v1454
        %v1456 = vpop.xlane.xlu0 %1455
        %v1457 = vadd.f32 %v1409, %v1411
        %1458 = vadd.xlane.f32.xlu0 %v1457
        %v1459 = vpop.xlane.xlu0 %1458
        %v1460 = vrcp.pop %v1414
        %v1461 = vrcp.pop %v1417
        %v1462 = vrcp.pop %v1420
        %v1463 = vrcp.pop %v1423
        %v1464 = vrcp.pop %v1426
        %v1465 = vrcp.pop %v1429
        %v1466 = vrcp.pop %v1432
        %v1467 = vrcp.pop %v1435
        %v1468 = vrcp.pop %v1438
        %v1469 = vrcp.pop %v1441
        %v1470 = vrcp.pop %v1444
        %v1471 = vrcp.pop %v1447
        %v1472 = vrcp.pop %v1450
        %v1473 = vrcp.pop %v1453
        %v1474 = vrcp.pop %v1456
        %v1475 = vrcp.pop %v1459
        %v1476 = vmul.f32 %v1349, %v1460
        %v1477 = vmul.f32 %v1351, %v1460
        %v1478 = vmul.f32 %v1353, %v1461
        %v1479 = vmul.f32 %v1355, %v1461
        %v1480 = vmul.f32 %v1357, %v1462
        %v1481 = vmul.f32 %v1359, %v1462
        %v1482 = vmul.f32 %v1361, %v1463
        %v1483 = vmul.f32 %v1363, %v1463
        %v1484 = vmul.f32 %v1365, %v1464
        %v1485 = vmul.f32 %v1367, %v1464
        %v1486 = vmul.f32 %v1369, %v1465
        %v1487 = vmul.f32 %v1371, %v1465
        %v1488 = vmul.f32 %v1373, %v1466
        %v1489 = vmul.f32 %v1375, %v1466
        %v1490 = vmul.f32 %v1377, %v1467
        %v1491 = vmul.f32 %v1379, %v1467
        %v1492 = vmul.f32 %v1381, %v1468
        %v1493 = vmul.f32 %v1383, %v1468
        %v1494 = vmul.f32 %v1385, %v1469
        %v1495 = vmul.f32 %v1387, %v1469
        %v1496 = vmul.f32 %v1389, %v1470
        %v1497 = vmul.f32 %v1391, %v1470
        %v1498 = vmul.f32 %v1393, %v1471
        %v1499 = vmul.f32 %v1395, %v1471
        %v1500 = vmul.f32 %v1397, %v1472
        %v1501 = vmul.f32 %v1399, %v1472
        %v1502 = vmul.f32 %v1401, %v1473
        %v1503 = vmul.f32 %v1403, %v1473
        %v1504 = vmul.f32 %v1405, %v1474
        %v1505 = vmul.f32 %v1407, %v1474
        %v1506 = vmul.f32 %v1409, %v1475
        %v1507 = vmul.f32 %v1411, %v1475
        %1508 = vst [vmem:[%s341] sm:$0xff] %v1476
        %1509 = vst [vmem:[%s341 + $0x8] sm:$0xff] %v1477
        %1510 = vst [vmem:[%s341 + $0x10] sm:$0xff] %v1478
        %1511 = vst [vmem:[%s341 + $0x18] sm:$0xff] %v1479
        %1512 = vst [vmem:[%s341 + $0x20] sm:$0xff] %v1480
        %1513 = vst [vmem:[%s341 + $0x28] sm:$0xff] %v1481
        %1514 = vst [vmem:[%s341 + $0x30] sm:$0xff] %v1482
        %1515 = vst [vmem:[%s341 + $0x38] sm:$0xff] %v1483
        %1516 = vst [vmem:[%s341 + $0x40] sm:$0xff] %v1484
        %1517 = vst [vmem:[%s341 + $0x48] sm:$0xff] %v1485
        %1518 = vst [vmem:[%s341 + $0x50] sm:$0xff] %v1486
        %1519 = vst [vmem:[%s341 + $0x58] sm:$0xff] %v1487
        %1520 = vst [vmem:[%s341 + $0x60] sm:$0xff] %v1488
        %1521 = vst [vmem:[%s341 + $0x68] sm:$0xff] %v1489
        %1522 = vst [vmem:[%s341 + $0x70] sm:$0xff] %v1490
        %1523 = vst [vmem:[%s341 + $0x78] sm:$0xff] %v1491
        %1524 = vst [vmem:[%s341 + $0x80] sm:$0xff] %v1492
        %1525 = vst [vmem:[%s341 + $0x88] sm:$0xff] %v1493
        %1526 = vst [vmem:[%s341 + $0x90] sm:$0xff] %v1494
        %1527 = vst [vmem:[%s341 + $0x98] sm:$0xff] %v1495
        %1528 = vst [vmem:[%s341 + $0xa0] sm:$0xff] %v1496
        %1529 = vst [vmem:[%s341 + $0xa8] sm:$0xff] %v1497
        %1530 = vst [vmem:[%s341 + $0xb0] sm:$0xff] %v1498
        %1531 = vst [vmem:[%s341 + $0xb8] sm:$0xff] %v1499
        %1532 = vst [vmem:[%s341 + $0xc0] sm:$0xff] %v1500
        %1533 = vst [vmem:[%s341 + $0xc8] sm:$0xff] %v1501
        %1534 = vst [vmem:[%s341 + $0xd0] sm:$0xff] %v1502
        %1535 = vst [vmem:[%s341 + $0xd8] sm:$0xff] %v1503
        %1536 = vst [vmem:[%s341 + $0xe0] sm:$0xff] %v1504
        %1537 = vst [vmem:[%s341 + $0xe8] sm:$0xff] %v1505
        %1538 = vst [vmem:[%s341 + $0xf0] sm:$0xff] %v1506
        %1539 = vst [vmem:[%s341 + $0xf8] sm:$0xff] %v1507
        %v1540 = vld [vmem:[#allocation3] sm:$0xff]
        %v1541 = vld [vmem:[#allocation3 + $0x8] sm:$0xff]
        %v1542 = vpack.c.bf16 %v1478, %v1476
        %v1543 = vpack.c.bf16 %v1479, %v1477
        %v1544 = vpack.c.bf16 %v1482, %v1480
        %v1545 = vpack.c.bf16 %v1483, %v1481
        %v1546 = vpack.c.bf16 %v1486, %v1484
        %v1547 = vpack.c.bf16 %v1487, %v1485
        %v1548 = vpack.c.bf16 %v1490, %v1488
        %v1549 = vpack.c.bf16 %v1491, %v1489
        %v1550 = vpack.c.bf16 %v1494, %v1492
        %v1551 = vpack.c.bf16 %v1495, %v1493
        %v1552 = vpack.c.bf16 %v1498, %v1496
        %v1553 = vpack.c.bf16 %v1499, %v1497
        %v1554 = vpack.c.bf16 %v1502, %v1500
        %v1555 = vpack.c.bf16 %v1503, %v1501
        %v1556 = vpack.c.bf16 %v1506, %v1504
        %v1557 = vpack.c.bf16 %v1507, %v1505
        %v1560 = vunpack.c.l.b16 %v1540
        %v1561 = vunpack.c.h.b16 %v1540
        %v1562 = vunpack.c.l.b16 %v1541
        %v1563 = vunpack.c.h.b16 %v1541
        %v1564 = vpack.c.b16 %v1562, %v1560
        %v1565 = vpack.c.b16 %v1563, %v1561
        %1568 = vmatprep.subr.bf16.mxu0 %v1557
        %1569 = vmatpush1.bf16.xpose.msra.mxu0 %v1556
        %1570 = vmatprep.subr.bf16.mxu0 %v1555
        %1571 = vmatpush1.bf16.xpose.msra.mxu0 %v1554
        %1572 = vmatprep.subr.bf16.mxu0 %v1553
        %1573 = vmatpush1.bf16.xpose.msra.mxu0 %v1552
        %1574 = vmatprep.subr.bf16.mxu0 %v1551
        %1575 = vmatpush1.bf16.xpose.msra.mxu0 %v1550
        %1576 = vmatprep.subr.bf16.mxu0 %v1549
        %1577 = vmatpush1.bf16.xpose.msra.mxu0 %v1548
        %1578 = vmatprep.subr.bf16.mxu0 %v1547
        %1579 = vmatpush1.bf16.xpose.msra.mxu0 %v1546
        %1580 = vmatprep.subr.bf16.mxu0 %v1545
        %1581 = vmatpush1.bf16.xpose.msra.mxu0 %v1544
        %1582 = vmatprep.subr.bf16.mxu0 %v1543
        %1583 = vmatpush1.bf16.xpose.msra.mxu0 %v1542
        %1584 = vmatprep.subr.bf16.mxu0 0
        %1585 = vmatpush2.bf16.xpose.msra.mxu0 0
        %1586 = vmatprep.subr.bf16.mxu0 0
        %1587 = vmatpush2.bf16.xpose.msra.mxu0 0
        %1588 = vmatprep.subr.bf16.mxu0 0
        %1589 = vmatpush2.bf16.xpose.msra.mxu0 0
        %1590 = vmatprep.subr.bf16.mxu0 0
        %1591 = vmatpush2.bf16.xpose.msra.mxu0 0
        %1592 = vmatprep.subr.bf16.mxu0 0
        %1593 = vmatpush2.bf16.xpose.msra.mxu0 0
        %1594 = vmatprep.subr.bf16.mxu0 0
        %1595 = vmatpush2.bf16.xpose.msra.mxu0 0
        %1596 = vmatprep.subr.bf16.mxu0 0
        %1597 = vmatpush2.bf16.xpose.msra.mxu0 0
        %1598 = vmatprep.subr.bf16.mxu0 0
        %1599 = vmatpush2.bf16.xpose.msra.mxu0 0
        %1600 = vmatprep.mubr.bf16.mxu0 %v1565
        %1601 = vmatmul.mubr.bf16.gmra.mxu0 %v1564
        %v1602 = vpop.f32.mrf.mxu0
        %v1603 = vadd.f32 0.0, %v1602
        %v1604 = vpop.f32.mrf.mxu0
        %v1605 = vpop.f32.mrf.mxu0
        %v1606 = vadd.f32 0.0, %v1605
        %v1607 = vpop.f32.mrf.mxu0
        %1608 = vdwg.mxu0
        %s1609 = sld [smem:[#allocation4]]
        %s1610 = sshra.s32 %s354, 7
        %s1611 = sand.u32 %s354, 127
        %s1612 = smul.addr %s1610, 8
        %s1613 = scalar_lea.vmem %s351, %s1612
        %v1614 = vld [vmem:[%s1613] sm:$0xff]
        %v1615 = vld [vmem:[%s1613 + $0x10] sm:$0xff]
        %v1616 = vstv %s1609
        %v1617 = vmul.f32 %v1616, %v1603
        %v1618 = vmul.f32 %v1616, %v1606
        %v1619 = vadd.f32 %v1617, %v1614
        %v1620 = vadd.f32 %v1618, %v1615
        %1621 = vst [vmem:[%s334] sm:$0xff] %v1619
        %1622 = vst [vmem:[%s334 + $0x8] sm:$0xff] %v1620
        %s1623 = sand.u32 %s206, 1
        %s1624 = scalar_lea.sflag [#allocation6], %s1623
        %s1625 = sand.u32 %s206, 1
        %s1626 = smul.addr %s1625, 16
        %s1627 = scalar_lea.vmem [#allocation5], %s1626
        %s1628 = sand.u32 %s234, 1
        %s1629 = scalar_lea.sflag [#allocation8], %s1628
        %s1630 = sand.u32 %s234, 1
        %s1631 = smul.addr %s1630, 256
        %s1632 = scalar_lea.vmem [#allocation7], %s1631
        // Predicated region
        $region53: #{tpu_custom_call.1} parent=47 // pred_check
          %p1633 = pneg %p216
        $region54: #{tpu_custom_call.1} parent=47 // pred_check_branch
          %1635 = sbr.rel (%p1633) target = $region56
        $region55: #{tpu_custom_call.1} parent=47 // pred_region
          %s1637 = ssub.s32 256, 256
          %1638 = vsyncadd %s1624, %s1637
          %s1639 = smul.addr %s31, 4
          %s1640 = sadd.s32 %s32, %s1639
          %s1641 = smul.addr %s1640, 128
          %s1642 = scalar_lea.hbm %s7, %s1641
          %s1643 = sshll.u32 %s1627, 4
          %s1644 = int_to_ptr.vmem [resolvable:$true] %s1643
          %1649 = dma.vmem_to_hbm [thread:$0]  %s1644, 256, %s1642, %s1624, 128, 256, 8
        $region56: #{tpu_custom_call.1} parent=47 // pred_fallthru
          _
        // Predicated region
        $region57: #{tpu_custom_call.1} parent=47 // pred_check
          %p1650 = pneg %p244
        $region58: #{tpu_custom_call.1} parent=47 // pred_check_branch
          %1652 = sbr.rel (%p1650) target = $region60
        $region59: #{tpu_custom_call.1} parent=47 // pred_region
          %s1653 = smul.u32 16, %s32
          %s1655 = ssub.s32 4096, 4096
          %1656 = vsyncadd %s1629, %s1655
          %s1657 = smul.addr %s1653, 2
          %s1658 = smul.addr %s31, 64
          %s1659 = sadd.s32 %s1657, %s1658
          %s1660 = smul.addr %s1659, 128
          %s1661 = scalar_lea.hbm %s8, %s1660
          %s1662 = sshll.u32 %s1632, 4
          %s1663 = int_to_ptr.vmem [resolvable:$true] %s1662
          %1668 = dma.vmem_to_hbm [thread:$0]  %s1663, 4096, %s1661, %s1629, 256, 256, 16
        $region60: #{tpu_custom_call.1} parent=47 // pred_fallthru
          _
      $region48: #{tpu_custom_call.1} parent=5 // pred_fallthru
        _
      %p1669 = scmp.le.s32.totalorder 2, %s22
      // Predicated region
      $region61: #{tpu_custom_call.1} parent=5 // pred_check
        %p1670 = pneg %p1669
      $region62: #{tpu_custom_call.1} parent=5 // pred_check_branch
        %1672 = sbr.rel (%p1670) target = $region64
      $region63: #{tpu_custom_call.1} parent=5 // pred_region
        %s1673 = ssub.s32 %s22, 2
        // Predicated region
        $region65: #{tpu_custom_call.1} parent=63 // pred_check
          %p1674 = pneg %p222
        $region66: #{tpu_custom_call.1} parent=63 // pred_check_branch
          %1676 = sbr.rel (%p1674) target = $region68
        $region67: #{tpu_custom_call.1} parent=63 // pred_region
          %s1677 = sand.u32 %s207, 1
          %s1678 = scalar_lea.sflag [#allocation6], %s1677
          %s1679 = sand.u32 %s207, 1
          %s1680 = smul.addr %s1679, 16
          %s1681 = scalar_lea.vmem [#allocation5], %s1680
          %1682 = dma.done %s1678, 256
        $region68: #{tpu_custom_call.1} parent=63 // pred_fallthru
          _
        // Predicated region
        $region69: #{tpu_custom_call.1} parent=63 // pred_check
          %p1683 = pneg %p250
        $region70: #{tpu_custom_call.1} parent=63 // pred_check_branch
          %1685 = sbr.rel (%p1683) target = $region72
        $region71: #{tpu_custom_call.1} parent=63 // pred_region
          %s1686 = sand.u32 %s235, 1
          %s1687 = scalar_lea.sflag [#allocation8], %s1686
          %s1688 = sand.u32 %s235, 1
          %s1689 = smul.addr %s1688, 256
          %s1690 = scalar_lea.vmem [#allocation7], %s1689
          %1691 = dma.done %s1687, 4096
        $region72: #{tpu_custom_call.1} parent=63 // pred_fallthru
          _
      $region64: #{tpu_custom_call.1} parent=5 // pred_fallthru
        _
    $region6: #{tpu_custom_call.1} parent=1 // loop_footer
      %s26 = sadd.s32 1, %s22
    $region7: #{tpu_custom_call.1} parent=1 // loop_footer_branch
      %21 = sbr.rel target = $region3
    $region8: #{tpu_custom_call.1} parent=1 // loop_exit
      _
    %1692 = vsyncpa [#allocation6], 1
    %s1693 = scalar_lea.sflag [#allocation6], 1
    %1694 = vsyncpa %s1693, 1
    %1695 = vsyncpa [#allocation8], 1
    %s1696 = scalar_lea.sflag [#allocation8], 1
    %1697 = vsyncpa %s1696, 1

</llo_original>
